<compile_context>
chip_gen: v7x
topology: tpu7x:2x2x1
jax: 0.10.0
libtpu: 0.0.40
codegen_flags: <defaults>
</compile_context>

<pallas_src>
import jax
import jax.numpy as jnp
from jax.experimental import pallas as pl
from jax.experimental.pallas import tpu as pltpu


def _encoder_lstm_kernel(x_ref, wih_ref, whh_ref, b_ref, h_out_ref, c_out_ref, gx_sc):
    """Single-invocation LSTM over the full sequence.

    x_ref:   (T, B, E)   time-major embedded inputs (B already sublane-padded)
    wih_ref: (E, 4H)     W_ih^T
    whh_ref: (H, 4H)     W_hh^T
    b_ref:   (1, 4H)     b_ih + b_hh
    h_out_ref, c_out_ref: (B, H) final hidden / cell state
    gx_sc:   (T, B, 4H)  VMEM scratch holding the precomputed input projection
    """
    T, B, E = x_ref.shape
    H = h_out_ref.shape[-1]

    # --- hoisted input projection: one matmul for all timesteps ---------------
    x_all = x_ref[...].reshape(T * B, E)                                   # (T*B, E)
    gx = jnp.dot(x_all, wih_ref[...], preferred_element_type=jnp.float32)  # (T*B, 4H)
    gx = gx + b_ref[...]                                                   # bias once
    gx_sc[...] = gx.reshape(T, B, 4 * H)

    whh = whh_ref[...]                                                     # (H, 4H), resident

    h0 = jnp.zeros((B, H), jnp.float32)
    c0 = jnp.zeros((B, H), jnp.float32)

    def step(t, carry):
        h_prev, c_prev = carry
        # gates: (B, 4H), PyTorch order [i, f, g, o]
        gates = gx_sc[t] + jnp.dot(h_prev, whh, preferred_element_type=jnp.float32)
        i_g = jax.nn.sigmoid(gates[:, 0 * H:1 * H])
        f_g = jax.nn.sigmoid(gates[:, 1 * H:2 * H])
        g_g = jnp.tanh(gates[:, 2 * H:3 * H])
        o_g = jax.nn.sigmoid(gates[:, 3 * H:4 * H])
        c_new = f_g * c_prev + i_g * g_g
        h_new = o_g * jnp.tanh(c_new)
        return h_new, c_new

    # T is static and tiny -> fully unrolled; gives LLO scheduler cross-step visibility.
    h_fin, c_fin = jax.lax.fori_loop(0, T, step, (h0, c0), unroll=True)

    h_out_ref[...] = h_fin.astype(h_out_ref.dtype)
    c_out_ref[...] = c_fin.astype(c_out_ref.dtype)


def lstm_pallas(x_emb_tbe, w_ih, w_hh, b_ih, b_hh):
    """x_emb_tbe: (T, B, E) float32.  Returns (h, c) each (B, H) float32."""
    T, B, E = x_emb_tbe.shape
    H4 = w_ih.shape[0]
    H = H4 // 4

    # pad batch to the f32 sublane boundary (multiple of 8)
    B_pad = max(8, ((B + 7) // 8) * 8)
    x_pad = x_emb_tbe.astype(jnp.float32)
    if B_pad != B:
        x_pad = jnp.pad(x_pad, ((0, 0), (0, B_pad - B), (0, 0)))

    # pre-transpose weights for row-major (K, N) MXU layout; fold the two biases
    w_ih_t = jnp.asarray(w_ih, jnp.float32).T                    # (E, 4H)
    w_hh_t = jnp.asarray(w_hh, jnp.float32).T                    # (H, 4H)
    bias = (jnp.asarray(b_ih, jnp.float32)
            + jnp.asarray(b_hh, jnp.float32)).reshape(1, H4)     # (1, 4H)

    vmem = pl.BlockSpec(memory_space=pltpu.MemorySpace.VMEM)
    h, c = pl.pallas_call(
        _encoder_lstm_kernel,
        out_shape=(
            jax.ShapeDtypeStruct((B_pad, H), jnp.float32),
            jax.ShapeDtypeStruct((B_pad, H), jnp.float32),
        ),
        in_specs=[vmem, vmem, vmem, vmem],
        out_specs=(vmem, vmem),
        scratch_shapes=[pltpu.VMEM((T, B_pad, H4), jnp.float32)],   # gates_x
    )(x_pad, w_ih_t, w_hh_t, bias)

    return h[:B], c[:B]


def encoder_forward(x_ids, params):
    """x_ids: (B, T) int32 token ids.  Returns (hidden, cell) each (1, B, H)."""
    emb = params["embedding"]                                    # (V, E), row 0 == 0 (padding_idx=0)
    # fused gather + time-major transpose: (T, B, E) directly
    x_tbe = jnp.take(emb, x_ids.T, axis=0).astype(jnp.float32)
    h, c = lstm_pallas(x_tbe, params["w_ih"], params["w_hh"],
                       params["b_ih"], params["b_hh"])
    return h[None, :, :], c[None, :, :]


def _lstm_reference(x_emb_tbe, w_ih, w_hh, b_ih, b_hh):
    """Pure-JAX reference (lax.scan) for verification."""
    T, B, E = x_emb_tbe.shape
    H = w_hh.shape[1]

    def step(carry, x_t):
        h, c = carry
        gates = x_t @ w_ih.T + h @ w_hh.T + b_ih + b_hh
        i, f, g, o = jnp.split(gates, 4, axis=-1)
        c_new = jax.nn.sigmoid(f) * c + jax.nn.sigmoid(i) * jnp.tanh(g)
        h_new = jax.nn.sigmoid(o) * jnp.tanh(c_new)
        return (h_new, c_new), None

    init = (jnp.zeros((B, H), jnp.float32), jnp.zeros((B, H), jnp.float32))
    (h, c), _ = jax.lax.scan(step, init, x_emb_tbe)
    return h, c


def init_params(key, vocab_size, embed_dim, hidden_dim):
    k1, k2, k3, k4, k5 = jax.random.split(key, 5)
    bound = 1.0 / jnp.sqrt(hidden_dim)
    emb = jax.random.normal(k1, (vocab_size, embed_dim), jnp.float32)
    emb = emb.at[0].set(0.0)                                     # padding_idx=0
    return {
        "embedding": emb,
        "w_ih": jax.random.uniform(k2, (4 * hidden_dim, embed_dim), jnp.float32, -bound, bound),
        "w_hh": jax.random.uniform(k3, (4 * hidden_dim, hidden_dim), jnp.float32, -bound, bound),
        "b_ih": jax.random.uniform(k4, (4 * hidden_dim,), jnp.float32, -bound, bound),
        "b_hh": jax.random.uniform(k5, (4 * hidden_dim,), jnp.float32, -bound, bound),
    }


if __name__ == "__main__":
    # small shapes consistent with the module's forward (hidden_dim = 64 in the spec)
    B, T = 2, 8
    vocab_size, embed_dim, hidden_dim = 20, 16, 64

    key = jax.random.PRNGKey(0)
    kp, kx = jax.random.split(key)
    params = init_params(kp, vocab_size, embed_dim, hidden_dim)
    x_ids = jax.random.randint(kx, (B, T), 0, vocab_size, dtype=jnp.int32)

    hidden, cell = encoder_forward(x_ids, params)
    jax.block_until_ready((hidden, cell))
    assert hidden.shape == (1, B, hidden_dim) and cell.shape == (1, B, hidden_dim)

    # verify against pure-JAX reference
    x_tbe = jnp.take(params["embedding"], x_ids.T, axis=0).astype(jnp.float32)
    h_ref, c_ref = _lstm_reference(x_tbe, params["w_ih"], params["w_hh"],
                                   params["b_ih"], params["b_hh"])
    assert jnp.allclose(hidden[0], h_ref, atol=1e-5), "hidden mismatch"
    assert jnp.allclose(cell[0], c_ref, atol=1e-5), "cell mismatch"

    print("KERNEL_OK")
</pallas_src>

<mosaic_0001>
module attributes {stable_mosaic.version = 11 : i64} {
  func.func @_encoder_lstm_kernel(%arg0: memref<8x8x16xf32, #tpu.memory_space<vmem>>, %arg1: memref<16x256xf32, #tpu.memory_space<vmem>>, %arg2: memref<64x256xf32, #tpu.memory_space<vmem>>, %arg3: memref<1x256xf32, #tpu.memory_space<vmem>>, %arg4: memref<8x64xf32, #tpu.memory_space<vmem>>, %arg5: memref<8x64xf32, #tpu.memory_space<vmem>>, %arg6: memref<8x8x256xf32, #tpu.memory_space<vmem>>) attributes {dimension_semantics = [], scalar_prefetch = 0 : i64, scratch_operands = 1 : i64, tpu.core_type = #tpu.core_type<tc>} {
    %c0 = arith.constant 0 : index
    %c0_0 = arith.constant 0 : index
    %c0_1 = arith.constant 0 : index
    %0 = vector.load %arg0[%c0, %c0_0, %c0_1] : memref<8x8x16xf32, #tpu.memory_space<vmem>>, vector<8x8x16xf32>
    %1 = vector.shape_cast %0 : vector<8x8x16xf32> to vector<64x16xf32>
    %c0_2 = arith.constant 0 : index
    %c0_3 = arith.constant 0 : index
    %2 = vector.load %arg1[%c0_2, %c0_3] : memref<16x256xf32, #tpu.memory_space<vmem>>, vector<16x256xf32>
    %cst = arith.constant dense<0.000000e+00> : vector<64x256xf32>
    %3 = tpu.matmul %1, %2, %cst {dimension_numbers = #tpu.dot_dimension_numbers<[1], [0], [0], [1], [0, 0, 1, 1], [], []>} : vector<64x16xf32>, vector<16x256xf32>, vector<64x256xf32> -> vector<64x256xf32>
    %c0_4 = arith.constant 0 : index
    %c0_5 = arith.constant 0 : index
    %4 = vector.load %arg3[%c0_4, %c0_5] : memref<1x256xf32, #tpu.memory_space<vmem>>, vector<1x256xf32>
    %5 = vector.broadcast %4 : vector<1x256xf32> to vector<64x256xf32>
    %6 = arith.addf %3, %5 : vector<64x256xf32>
    %7 = vector.shape_cast %6 : vector<64x256xf32> to vector<8x8x256xf32>
    %c0_6 = arith.constant 0 : index
    %c0_7 = arith.constant 0 : index
    %c0_8 = arith.constant 0 : index
    %8 = vector.load %arg6[%c0_6, %c0_7, %c0_8] : memref<8x8x256xf32, #tpu.memory_space<vmem>>, vector<8x8x256xf32>
    tpu.vector_store %arg6[%c0_6, %c0_7, %c0_8], %7 {strides = array<i32>} : memref<8x8x256xf32, #tpu.memory_space<vmem>>, vector<8x8x256xf32>,
    %c0_9 = arith.constant 0 : index
    %c0_10 = arith.constant 0 : index
    %9 = vector.load %arg2[%c0_9, %c0_10] : memref<64x256xf32, #tpu.memory_space<vmem>>, vector<64x256xf32>
    %cst_11 = arith.constant 0.000000e+00 : f32
    %10 = vector.broadcast %cst_11 : f32 to vector<8x64xf32>
    %cst_12 = arith.constant 0.000000e+00 : f32
    %11 = vector.broadcast %cst_12 : f32 to vector<8x64xf32>
    %c0_i32 = arith.constant 0 : i32
    %12 = arith.index_cast %c0_i32 : i32 to index
    %c0_13 = arith.constant 0 : index
    %c0_14 = arith.constant 0 : index
    %13 = vector.load %arg6[%12, %c0_13, %c0_14] : memref<8x8x256xf32, #tpu.memory_space<vmem>>, vector<1x8x256xf32>
    %14 = vector.shape_cast %13 : vector<1x8x256xf32> to vector<8x256xf32>
    %cst_15 = arith.constant dense<0.000000e+00> : vector<8x256xf32>
    %15 = tpu.matmul %10, %9, %cst_15 {dimension_numbers = #tpu.dot_dimension_numbers<[1], [0], [0], [1], [0, 0, 1, 1], [], []>} : vector<8x64xf32>, vector<64x256xf32>, vector<8x256xf32> -> vector<8x256xf32>
    %16 = arith.addf %14, %15 : vector<8x256xf32>
    %17 = vector.extract_strided_slice %16 {offsets = [0, 0], sizes = [8, 64], strides = [1, 1]} : vector<8x256xf32> to vector<8x64xf32>
    %18 = arith.negf %17 : vector<8x64xf32>
    %19 = math.exp %18 : vector<8x64xf32>
    %cst_16 = arith.constant 1.000000e+00 : f32
    %20 = vector.broadcast %cst_16 : f32 to vector<8x64xf32>
    %21 = arith.addf %20, %19 : vector<8x64xf32>
    %22 = arith.divf %20, %21 : vector<8x64xf32>
    %23 = vector.extract_strided_slice %16 {offsets = [0, 64], sizes = [8, 64], strides = [1, 1]} : vector<8x256xf32> to vector<8x64xf32>
    %24 = arith.negf %23 : vector<8x64xf32>
    %25 = math.exp %24 : vector<8x64xf32>
    %cst_17 = arith.constant 1.000000e+00 : f32
    %26 = vector.broadcast %cst_17 : f32 to vector<8x64xf32>
    %27 = arith.addf %26, %25 : vector<8x64xf32>
    %28 = arith.divf %26, %27 : vector<8x64xf32>
    %29 = vector.extract_strided_slice %16 {offsets = [0, 128], sizes = [8, 64], strides = [1, 1]} : vector<8x256xf32> to vector<8x64xf32>
    %30 = math.tanh %29 : vector<8x64xf32>
    %31 = vector.extract_strided_slice %16 {offsets = [0, 192], sizes = [8, 64], strides = [1, 1]} : vector<8x256xf32> to vector<8x64xf32>
    %32 = arith.negf %31 : vector<8x64xf32>
    %33 = math.exp %32 : vector<8x64xf32>
    %cst_18 = arith.constant 1.000000e+00 : f32
    %34 = vector.broadcast %cst_18 : f32 to vector<8x64xf32>
    %35 = arith.addf %34, %33 : vector<8x64xf32>
    %36 = arith.divf %34, %35 : vector<8x64xf32>
    %37 = arith.mulf %28, %11 : vector<8x64xf32>
    %38 = arith.mulf %22, %30 : vector<8x64xf32>
    %39 = arith.addf %37, %38 : vector<8x64xf32>
    %40 = math.tanh %39 : vector<8x64xf32>
    %41 = arith.mulf %36, %40 : vector<8x64xf32>
    %c1_i32 = arith.constant 1 : i32
    %42 = arith.index_cast %c1_i32 : i32 to index
    %c0_19 = arith.constant 0 : index
    %c0_20 = arith.constant 0 : index
    %43 = vector.load %arg6[%42, %c0_19, %c0_20] : memref<8x8x256xf32, #tpu.memory_space<vmem>>, vector<1x8x256xf32>
    %44 = vector.shape_cast %43 : vector<1x8x256xf32> to vector<8x256xf32>
    %cst_21 = arith.constant dense<0.000000e+00> : vector<8x256xf32>
    %45 = tpu.matmul %41, %9, %cst_21 {dimension_numbers = #tpu.dot_dimension_numbers<[1], [0], [0], [1], [0, 0, 1, 1], [], []>} : vector<8x64xf32>, vector<64x256xf32>, vector<8x256xf32> -> vector<8x256xf32>
    %46 = arith.addf %44, %45 : vector<8x256xf32>
    %47 = vector.extract_strided_slice %46 {offsets = [0, 0], sizes = [8, 64], strides = [1, 1]} : vector<8x256xf32> to vector<8x64xf32>
    %48 = arith.negf %47 : vector<8x64xf32>
    %49 = math.exp %48 : vector<8x64xf32>
    %cst_22 = arith.constant 1.000000e+00 : f32
    %50 = vector.broadcast %cst_22 : f32 to vector<8x64xf32>
    %51 = arith.addf %50, %49 : vector<8x64xf32>
    %52 = arith.divf %50, %51 : vector<8x64xf32>
    %53 = vector.extract_strided_slice %46 {offsets = [0, 64], sizes = [8, 64], strides = [1, 1]} : vector<8x256xf32> to vector<8x64xf32>
    %54 = arith.negf %53 : vector<8x64xf32>
    %55 = math.exp %54 : vector<8x64xf32>
    %cst_23 = arith.constant 1.000000e+00 : f32
    %56 = vector.broadcast %cst_23 : f32 to vector<8x64xf32>
    %57 = arith.addf %56, %55 : vector<8x64xf32>
    %58 = arith.divf %56, %57 : vector<8x64xf32>
    %59 = vector.extract_strided_slice %46 {offsets = [0, 128], sizes = [8, 64], strides = [1, 1]} : vector<8x256xf32> to vector<8x64xf32>
    %60 = math.tanh %59 : vector<8x64xf32>
    %61 = vector.extract_strided_slice %46 {offsets = [0, 192], sizes = [8, 64], strides = [1, 1]} : vector<8x256xf32> to vector<8x64xf32>
    %62 = arith.negf %61 : vector<8x64xf32>
    %63 = math.exp %62 : vector<8x64xf32>
    %cst_24 = arith.constant 1.000000e+00 : f32
    %64 = vector.broadcast %cst_24 : f32 to vector<8x64xf32>
    %65 = arith.addf %64, %63 : vector<8x64xf32>
    %66 = arith.divf %64, %65 : vector<8x64xf32>
    %67 = arith.mulf %58, %39 : vector<8x64xf32>
    %68 = arith.mulf %52, %60 : vector<8x64xf32>
    %69 = arith.addf %67, %68 : vector<8x64xf32>
    %70 = math.tanh %69 : vector<8x64xf32>
    %71 = arith.mulf %66, %70 : vector<8x64xf32>
    %c2_i32 = arith.constant 2 : i32
    %72 = arith.index_cast %c2_i32 : i32 to index
    %c0_25 = arith.constant 0 : index
    %c0_26 = arith.constant 0 : index
    %73 = vector.load %arg6[%72, %c0_25, %c0_26] : memref<8x8x256xf32, #tpu.memory_space<vmem>>, vector<1x8x256xf32>
    %74 = vector.shape_cast %73 : vector<1x8x256xf32> to vector<8x256xf32>
    %cst_27 = arith.constant dense<0.000000e+00> : vector<8x256xf32>
    %75 = tpu.matmul %71, %9, %cst_27 {dimension_numbers = #tpu.dot_dimension_numbers<[1], [0], [0], [1], [0, 0, 1, 1], [], []>} : vector<8x64xf32>, vector<64x256xf32>, vector<8x256xf32> -> vector<8x256xf32>
    %76 = arith.addf %74, %75 : vector<8x256xf32>
    %77 = vector.extract_strided_slice %76 {offsets = [0, 0], sizes = [8, 64], strides = [1, 1]} : vector<8x256xf32> to vector<8x64xf32>
    %78 = arith.negf %77 : vector<8x64xf32>
    %79 = math.exp %78 : vector<8x64xf32>
    %cst_28 = arith.constant 1.000000e+00 : f32
    %80 = vector.broadcast %cst_28 : f32 to vector<8x64xf32>
    %81 = arith.addf %80, %79 : vector<8x64xf32>
    %82 = arith.divf %80, %81 : vector<8x64xf32>
    %83 = vector.extract_strided_slice %76 {offsets = [0, 64], sizes = [8, 64], strides = [1, 1]} : vector<8x256xf32> to vector<8x64xf32>
    %84 = arith.negf %83 : vector<8x64xf32>
    %85 = math.exp %84 : vector<8x64xf32>
    %cst_29 = arith.constant 1.000000e+00 : f32
    %86 = vector.broadcast %cst_29 : f32 to vector<8x64xf32>
    %87 = arith.addf %86, %85 : vector<8x64xf32>
    %88 = arith.divf %86, %87 : vector<8x64xf32>
    %89 = vector.extract_strided_slice %76 {offsets = [0, 128], sizes = [8, 64], strides = [1, 1]} : vector<8x256xf32> to vector<8x64xf32>
    %90 = math.tanh %89 : vector<8x64xf32>
    %91 = vector.extract_strided_slice %76 {offsets = [0, 192], sizes = [8, 64], strides = [1, 1]} : vector<8x256xf32> to vector<8x64xf32>
    %92 = arith.negf %91 : vector<8x64xf32>
    %93 = math.exp %92 : vector<8x64xf32>
    %cst_30 = arith.constant 1.000000e+00 : f32
    %94 = vector.broadcast %cst_30 : f32 to vector<8x64xf32>
    %95 = arith.addf %94, %93 : vector<8x64xf32>
    %96 = arith.divf %94, %95 : vector<8x64xf32>
    %97 = arith.mulf %88, %69 : vector<8x64xf32>
    %98 = arith.mulf %82, %90 : vector<8x64xf32>
    %99 = arith.addf %97, %98 : vector<8x64xf32>
    %100 = math.tanh %99 : vector<8x64xf32>
    %101 = arith.mulf %96, %100 : vector<8x64xf32>
    %c3_i32 = arith.constant 3 : i32
    %102 = arith.index_cast %c3_i32 : i32 to index
    %c0_31 = arith.constant 0 : index
    %c0_32 = arith.constant 0 : index
    %103 = vector.load %arg6[%102, %c0_31, %c0_32] : memref<8x8x256xf32, #tpu.memory_space<vmem>>, vector<1x8x256xf32>
    %104 = vector.shape_cast %103 : vector<1x8x256xf32> to vector<8x256xf32>
    %cst_33 = arith.constant dense<0.000000e+00> : vector<8x256xf32>
    %105 = tpu.matmul %101, %9, %cst_33 {dimension_numbers = #tpu.dot_dimension_numbers<[1], [0], [0], [1], [0, 0, 1, 1], [], []>} : vector<8x64xf32>, vector<64x256xf32>, vector<8x256xf32> -> vector<8x256xf32>
    %106 = arith.addf %104, %105 : vector<8x256xf32>
    %107 = vector.extract_strided_slice %106 {offsets = [0, 0], sizes = [8, 64], strides = [1, 1]} : vector<8x256xf32> to vector<8x64xf32>
    %108 = arith.negf %107 : vector<8x64xf32>
    %109 = math.exp %108 : vector<8x64xf32>
    %cst_34 = arith.constant 1.000000e+00 : f32
    %110 = vector.broadcast %cst_34 : f32 to vector<8x64xf32>
    %111 = arith.addf %110, %109 : vector<8x64xf32>
    %112 = arith.divf %110, %111 : vector<8x64xf32>
    %113 = vector.extract_strided_slice %106 {offsets = [0, 64], sizes = [8, 64], strides = [1, 1]} : vector<8x256xf32> to vector<8x64xf32>
    %114 = arith.negf %113 : vector<8x64xf32>
    %115 = math.exp %114 : vector<8x64xf32>
    %cst_35 = arith.constant 1.000000e+00 : f32
    %116 = vector.broadcast %cst_35 : f32 to vector<8x64xf32>
    %117 = arith.addf %116, %115 : vector<8x64xf32>
    %118 = arith.divf %116, %117 : vector<8x64xf32>
    %119 = vector.extract_strided_slice %106 {offsets = [0, 128], sizes = [8, 64], strides = [1, 1]} : vector<8x256xf32> to vector<8x64xf32>
    %120 = math.tanh %119 : vector<8x64xf32>
    %121 = vector.extract_strided_slice %106 {offsets = [0, 192], sizes = [8, 64], strides = [1, 1]} : vector<8x256xf32> to vector<8x64xf32>
    %122 = arith.negf %121 : vector<8x64xf32>
    %123 = math.exp %122 : vector<8x64xf32>
    %cst_36 = arith.constant 1.000000e+00 : f32
    %124 = vector.broadcast %cst_36 : f32 to vector<8x64xf32>
    %125 = arith.addf %124, %123 : vector<8x64xf32>
    %126 = arith.divf %124, %125 : vector<8x64xf32>
    %127 = arith.mulf %118, %99 : vector<8x64xf32>
    %128 = arith.mulf %112, %120 : vector<8x64xf32>
    %129 = arith.addf %127, %128 : vector<8x64xf32>
    %130 = math.tanh %129 : vector<8x64xf32>
    %131 = arith.mulf %126, %130 : vector<8x64xf32>
    %c4_i32 = arith.constant 4 : i32
    %132 = arith.index_cast %c4_i32 : i32 to index
    %c0_37 = arith.constant 0 : index
    %c0_38 = arith.constant 0 : index
    %133 = vector.load %arg6[%132, %c0_37, %c0_38] : memref<8x8x256xf32, #tpu.memory_space<vmem>>, vector<1x8x256xf32>
    %134 = vector.shape_cast %133 : vector<1x8x256xf32> to vector<8x256xf32>
    %cst_39 = arith.constant dense<0.000000e+00> : vector<8x256xf32>
    %135 = tpu.matmul %131, %9, %cst_39 {dimension_numbers = #tpu.dot_dimension_numbers<[1], [0], [0], [1], [0, 0, 1, 1], [], []>} : vector<8x64xf32>, vector<64x256xf32>, vector<8x256xf32> -> vector<8x256xf32>
    %136 = arith.addf %134, %135 : vector<8x256xf32>
    %137 = vector.extract_strided_slice %136 {offsets = [0, 0], sizes = [8, 64], strides = [1, 1]} : vector<8x256xf32> to vector<8x64xf32>
    %138 = arith.negf %137 : vector<8x64xf32>
    %139 = math.exp %138 : vector<8x64xf32>
    %cst_40 = arith.constant 1.000000e+00 : f32
    %140 = vector.broadcast %cst_40 : f32 to vector<8x64xf32>
    %141 = arith.addf %140, %139 : vector<8x64xf32>
    %142 = arith.divf %140, %141 : vector<8x64xf32>
    %143 = vector.extract_strided_slice %136 {offsets = [0, 64], sizes = [8, 64], strides = [1, 1]} : vector<8x256xf32> to vector<8x64xf32>
    %144 = arith.negf %143 : vector<8x64xf32>
    %145 = math.exp %144 : vector<8x64xf32>
    %cst_41 = arith.constant 1.000000e+00 : f32
    %146 = vector.broadcast %cst_41 : f32 to vector<8x64xf32>
    %147 = arith.addf %146, %145 : vector<8x64xf32>
    %148 = arith.divf %146, %147 : vector<8x64xf32>
    %149 = vector.extract_strided_slice %136 {offsets = [0, 128], sizes = [8, 64], strides = [1, 1]} : vector<8x256xf32> to vector<8x64xf32>
    %150 = math.tanh %149 : vector<8x64xf32>
    %151 = vector.extract_strided_slice %136 {offsets = [0, 192], sizes = [8, 64], strides = [1, 1]} : vector<8x256xf32> to vector<8x64xf32>
    %152 = arith.negf %151 : vector<8x64xf32>
    %153 = math.exp %152 : vector<8x64xf32>
    %cst_42 = arith.constant 1.000000e+00 : f32
    %154 = vector.broadcast %cst_42 : f32 to vector<8x64xf32>
    %155 = arith.addf %154, %153 : vector<8x64xf32>
    %156 = arith.divf %154, %155 : vector<8x64xf32>
    %157 = arith.mulf %148, %129 : vector<8x64xf32>
    %158 = arith.mulf %142, %150 : vector<8x64xf32>
    %159 = arith.addf %157, %158 : vector<8x64xf32>
    %160 = math.tanh %159 : vector<8x64xf32>
    %161 = arith.mulf %156, %160 : vector<8x64xf32>
    %c5_i32 = arith.constant 5 : i32
    %162 = arith.index_cast %c5_i32 : i32 to index
    %c0_43 = arith.constant 0 : index
    %c0_44 = arith.constant 0 : index
    %163 = vector.load %arg6[%162, %c0_43, %c0_44] : memref<8x8x256xf32, #tpu.memory_space<vmem>>, vector<1x8x256xf32>
    %164 = vector.shape_cast %163 : vector<1x8x256xf32> to vector<8x256xf32>
    %cst_45 = arith.constant dense<0.000000e+00> : vector<8x256xf32>
    %165 = tpu.matmul %161, %9, %cst_45 {dimension_numbers = #tpu.dot_dimension_numbers<[1], [0], [0], [1], [0, 0, 1, 1], [], []>} : vector<8x64xf32>, vector<64x256xf32>, vector<8x256xf32> -> vector<8x256xf32>
    %166 = arith.addf %164, %165 : vector<8x256xf32>
    %167 = vector.extract_strided_slice %166 {offsets = [0, 0], sizes = [8, 64], strides = [1, 1]} : vector<8x256xf32> to vector<8x64xf32>
    %168 = arith.negf %167 : vector<8x64xf32>
    %169 = math.exp %168 : vector<8x64xf32>
    %cst_46 = arith.constant 1.000000e+00 : f32
    %170 = vector.broadcast %cst_46 : f32 to vector<8x64xf32>
    %171 = arith.addf %170, %169 : vector<8x64xf32>
    %172 = arith.divf %170, %171 : vector<8x64xf32>
    %173 = vector.extract_strided_slice %166 {offsets = [0, 64], sizes = [8, 64], strides = [1, 1]} : vector<8x256xf32> to vector<8x64xf32>
    %174 = arith.negf %173 : vector<8x64xf32>
    %175 = math.exp %174 : vector<8x64xf32>
    %cst_47 = arith.constant 1.000000e+00 : f32
    %176 = vector.broadcast %cst_47 : f32 to vector<8x64xf32>
    %177 = arith.addf %176, %175 : vector<8x64xf32>
    %178 = arith.divf %176, %177 : vector<8x64xf32>
    %179 = vector.extract_strided_slice %166 {offsets = [0, 128], sizes = [8, 64], strides = [1, 1]} : vector<8x256xf32> to vector<8x64xf32>
    %180 = math.tanh %179 : vector<8x64xf32>
    %181 = vector.extract_strided_slice %166 {offsets = [0, 192], sizes = [8, 64], strides = [1, 1]} : vector<8x256xf32> to vector<8x64xf32>
    %182 = arith.negf %181 : vector<8x64xf32>
    %183 = math.exp %182 : vector<8x64xf32>
    %cst_48 = arith.constant 1.000000e+00 : f32
    %184 = vector.broadcast %cst_48 : f32 to vector<8x64xf32>
    %185 = arith.addf %184, %183 : vector<8x64xf32>
    %186 = arith.divf %184, %185 : vector<8x64xf32>
    %187 = arith.mulf %178, %159 : vector<8x64xf32>
    %188 = arith.mulf %172, %180 : vector<8x64xf32>
    %189 = arith.addf %187, %188 : vector<8x64xf32>
    %190 = math.tanh %189 : vector<8x64xf32>
    %191 = arith.mulf %186, %190 : vector<8x64xf32>
    %c6_i32 = arith.constant 6 : i32
    %192 = arith.index_cast %c6_i32 : i32 to index
    %c0_49 = arith.constant 0 : index
    %c0_50 = arith.constant 0 : index
    %193 = vector.load %arg6[%192, %c0_49, %c0_50] : memref<8x8x256xf32, #tpu.memory_space<vmem>>, vector<1x8x256xf32>
    %194 = vector.shape_cast %193 : vector<1x8x256xf32> to vector<8x256xf32>
    %cst_51 = arith.constant dense<0.000000e+00> : vector<8x256xf32>
    %195 = tpu.matmul %191, %9, %cst_51 {dimension_numbers = #tpu.dot_dimension_numbers<[1], [0], [0], [1], [0, 0, 1, 1], [], []>} : vector<8x64xf32>, vector<64x256xf32>, vector<8x256xf32> -> vector<8x256xf32>
    %196 = arith.addf %194, %195 : vector<8x256xf32>
    %197 = vector.extract_strided_slice %196 {offsets = [0, 0], sizes = [8, 64], strides = [1, 1]} : vector<8x256xf32> to vector<8x64xf32>
    %198 = arith.negf %197 : vector<8x64xf32>
    %199 = math.exp %198 : vector<8x64xf32>
    %cst_52 = arith.constant 1.000000e+00 : f32
    %200 = vector.broadcast %cst_52 : f32 to vector<8x64xf32>
    %201 = arith.addf %200, %199 : vector<8x64xf32>
    %202 = arith.divf %200, %201 : vector<8x64xf32>
    %203 = vector.extract_strided_slice %196 {offsets = [0, 64], sizes = [8, 64], strides = [1, 1]} : vector<8x256xf32> to vector<8x64xf32>
    %204 = arith.negf %203 : vector<8x64xf32>
    %205 = math.exp %204 : vector<8x64xf32>
    %cst_53 = arith.constant 1.000000e+00 : f32
    %206 = vector.broadcast %cst_53 : f32 to vector<8x64xf32>
    %207 = arith.addf %206, %205 : vector<8x64xf32>
    %208 = arith.divf %206, %207 : vector<8x64xf32>
    %209 = vector.extract_strided_slice %196 {offsets = [0, 128], sizes = [8, 64], strides = [1, 1]} : vector<8x256xf32> to vector<8x64xf32>
    %210 = math.tanh %209 : vector<8x64xf32>
    %211 = vector.extract_strided_slice %196 {offsets = [0, 192], sizes = [8, 64], strides = [1, 1]} : vector<8x256xf32> to vector<8x64xf32>
    %212 = arith.negf %211 : vector<8x64xf32>
    %213 = math.exp %212 : vector<8x64xf32>
    %cst_54 = arith.constant 1.000000e+00 : f32
    %214 = vector.broadcast %cst_54 : f32 to vector<8x64xf32>
    %215 = arith.addf %214, %213 : vector<8x64xf32>
    %216 = arith.divf %214, %215 : vector<8x64xf32>
    %217 = arith.mulf %208, %189 : vector<8x64xf32>
    %218 = arith.mulf %202, %210 : vector<8x64xf32>
    %219 = arith.addf %217, %218 : vector<8x64xf32>
    %220 = math.tanh %219 : vector<8x64xf32>
    %221 = arith.mulf %216, %220 : vector<8x64xf32>
    %c7_i32 = arith.constant 7 : i32
    %222 = arith.index_cast %c7_i32 : i32 to index
    %c0_55 = arith.constant 0 : index
    %c0_56 = arith.constant 0 : index
    %223 = vector.load %arg6[%222, %c0_55, %c0_56] : memref<8x8x256xf32, #tpu.memory_space<vmem>>, vector<1x8x256xf32>
    %224 = vector.shape_cast %223 : vector<1x8x256xf32> to vector<8x256xf32>
    %cst_57 = arith.constant dense<0.000000e+00> : vector<8x256xf32>
    %225 = tpu.matmul %221, %9, %cst_57 {dimension_numbers = #tpu.dot_dimension_numbers<[1], [0], [0], [1], [0, 0, 1, 1], [], []>} : vector<8x64xf32>, vector<64x256xf32>, vector<8x256xf32> -> vector<8x256xf32>
    %226 = arith.addf %224, %225 : vector<8x256xf32>
    %227 = vector.extract_strided_slice %226 {offsets = [0, 0], sizes = [8, 64], strides = [1, 1]} : vector<8x256xf32> to vector<8x64xf32>
    %228 = arith.negf %227 : vector<8x64xf32>
    %229 = math.exp %228 : vector<8x64xf32>
    %cst_58 = arith.constant 1.000000e+00 : f32
    %230 = vector.broadcast %cst_58 : f32 to vector<8x64xf32>
    %231 = arith.addf %230, %229 : vector<8x64xf32>
    %232 = arith.divf %230, %231 : vector<8x64xf32>
    %233 = vector.extract_strided_slice %226 {offsets = [0, 64], sizes = [8, 64], strides = [1, 1]} : vector<8x256xf32> to vector<8x64xf32>
    %234 = arith.negf %233 : vector<8x64xf32>
    %235 = math.exp %234 : vector<8x64xf32>
    %cst_59 = arith.constant 1.000000e+00 : f32
    %236 = vector.broadcast %cst_59 : f32 to vector<8x64xf32>
    %237 = arith.addf %236, %235 : vector<8x64xf32>
    %238 = arith.divf %236, %237 : vector<8x64xf32>
    %239 = vector.extract_strided_slice %226 {offsets = [0, 128], sizes = [8, 64], strides = [1, 1]} : vector<8x256xf32> to vector<8x64xf32>
    %240 = math.tanh %239 : vector<8x64xf32>
    %241 = vector.extract_strided_slice %226 {offsets = [0, 192], sizes = [8, 64], strides = [1, 1]} : vector<8x256xf32> to vector<8x64xf32>
    %242 = arith.negf %241 : vector<8x64xf32>
    %243 = math.exp %242 : vector<8x64xf32>
    %cst_60 = arith.constant 1.000000e+00 : f32
    %244 = vector.broadcast %cst_60 : f32 to vector<8x64xf32>
    %245 = arith.addf %244, %243 : vector<8x64xf32>
    %246 = arith.divf %244, %245 : vector<8x64xf32>
    %247 = arith.mulf %238, %219 : vector<8x64xf32>
    %248 = arith.mulf %232, %240 : vector<8x64xf32>
    %249 = arith.addf %247, %248 : vector<8x64xf32>
    %250 = math.tanh %249 : vector<8x64xf32>
    %251 = arith.mulf %246, %250 : vector<8x64xf32>
    %c8_i32 = arith.constant 8 : i32
    %c0_61 = arith.constant 0 : index
    %c0_62 = arith.constant 0 : index
    %252 = vector.load %arg4[%c0_61, %c0_62] : memref<8x64xf32, #tpu.memory_space<vmem>>, vector<8x64xf32>
    tpu.vector_store %arg4[%c0_61, %c0_62], %251 {strides = array<i32>} : memref<8x64xf32, #tpu.memory_space<vmem>>, vector<8x64xf32>,
    %c0_63 = arith.constant 0 : index
    %c0_64 = arith.constant 0 : index
    %253 = vector.load %arg5[%c0_63, %c0_64] : memref<8x64xf32, #tpu.memory_space<vmem>>, vector<8x64xf32>
    tpu.vector_store %arg5[%c0_63, %c0_64], %249 {strides = array<i32>} : memref<8x64xf32, #tpu.memory_space<vmem>>, vector<8x64xf32>,
    return
  }
}

</mosaic_0001>

<llo_original>
// kernel: tpu_custom_call.1
$region0: #{tpu_custom_call.1}
  #allocation0 [shape = 'u32[]', space=smem, size = 0x4, offset = 0x4, fixed_abs, tag = 'smem constant byte address 0x4 - core index']
  #allocation1 [shape = 'u32[144,128]{1,0:T(1,128)}', space=vmem, size = 0x12000, scoped, tag = 'internal scratch']
  #allocation2 [shape = 'f32[8,8,256]{2,1,0:T(8,128)}', space=vmem, size = 0x10000, scoped, tag = 'scratch operand']
  %s0 = inlined_call_operand.hbm [shape: f32[8,8,16], index: 0, kind: input, shape index: {}]
  %s1 = inlined_call_operand.hbm [shape: f32[16,256], index: 1, kind: input, shape index: {}]
  %s2 = inlined_call_operand.hbm [shape: f32[64,256], index: 2, kind: input, shape index: {}]
  %s3 = inlined_call_operand.vmem [shape: f32[1,256], index: 3, kind: input, shape index: {}]
  %s4 = inlined_call_operand.hbm [shape: f32[8,64], index: 4, kind: output, shape index: {0}]
  %s5 = inlined_call_operand.hbm [shape: f32[8,64], index: 5, kind: output, shape index: {1}]
  %6 = xla_tuple %s4, %s5
  %s7 = sld [smem:[#allocation0]]
  $region46: #{tpu_custom_call.1} parent=0
    _
  %s9 = ssub.s32 1, %s7
  %s10 = scalar_select 0, %s9, %s7
  $region1: #{tpu_custom_call.1} parent=0
    #allocation3 [shape = 'u8[32768]{0}', space=vmem, size = 0x8000, scoped, tag = 'input window, operand 0, single buffered']
    #allocation4 [shape = 's32[1]{0}', space=sflag, size = 0x4, scoped, tag = 'scoped memory for tpu_custom_call.1']
    #allocation5 [shape = 's32[1]{0}', space=sflag, size = 0x4, scoped, tag = 'scoped memory for tpu_custom_call.1']
    #allocation6 [shape = 'u8[16384]{0}', space=vmem, size = 0x4000, scoped, tag = 'input window, operand 1, single buffered']
    #allocation7 [shape = 's32[1]{0}', space=sflag, size = 0x4, scoped, tag = 'scoped memory for tpu_custom_call.1']
    #allocation8 [shape = 'u8[65536]{0}', space=vmem, size = 0x10000, scoped, tag = 'input window, operand 2, single buffered']
    #allocation9 [shape = 'u8[4096]{0}', space=vmem, size = 0x1000, scoped, tag = 'output window, operand 0, single buffered']
    #allocation10 [shape = 'u8[4096]{0}', space=vmem, size = 0x1000, scoped, tag = 'output window, operand 1, single buffered']
    #allocation11 [shape = 's32[1]{0}', space=sflag, size = 0x4, scoped, tag = 'scoped memory for tpu_custom_call.1']
    %11 = vsyncpa [#allocation4], 0
    %12 = vsyncpa [#allocation7], 0
    %13 = vsyncpa [#allocation5], 0
    %14 = vsyncpa [#allocation11], 0
    // Predicated region
    $region2: #{tpu_custom_call.1} parent=1 // pred_check
      _
    $region3: #{tpu_custom_call.1} parent=1 // pred_check_branch
      %16 = sbr.rel (0) target = $region5
    $region4: #{tpu_custom_call.1} parent=1 // pred_region
      %s18 = ssub.s32 1024, 1024
      %19 = vsyncadd [#allocation4], %s18
      %s20 = sshll.u32 [#allocation3], 4
      %s21 = int_to_ptr.vmem [resolvable:$true] %s20
      %26 = dma.hbm_to_vmem [thread:$0]  %s0, 1024, %s21, [#allocation4], 128, 128, 8
    $region5: #{tpu_custom_call.1} parent=1 // pred_fallthru
      _
    // Predicated region
    $region6: #{tpu_custom_call.1} parent=1 // pred_check
      _
    $region7: #{tpu_custom_call.1} parent=1 // pred_check_branch
      %28 = sbr.rel (0) target = $region9
    $region8: #{tpu_custom_call.1} parent=1 // pred_region
      %s30 = ssub.s32 512, 512
      %31 = vsyncadd [#allocation7], %s30
      %s32 = sshll.u32 [#allocation6], 4
      %s33 = int_to_ptr.vmem [resolvable:$true] %s32
      %38 = dma.hbm_to_vmem [thread:$0]  %s1, 512, %s33, [#allocation7], 256, 256, 16
    $region9: #{tpu_custom_call.1} parent=1 // pred_fallthru
      _
    // Predicated region
    $region10: #{tpu_custom_call.1} parent=1 // pred_check
      _
    $region11: #{tpu_custom_call.1} parent=1 // pred_check_branch
      %40 = sbr.rel (0) target = $region13
    $region12: #{tpu_custom_call.1} parent=1 // pred_region
      %s42 = ssub.s32 2048, 2048
      %43 = vsyncadd [#allocation7], %s42
      %s44 = sshll.u32 [#allocation8], 4
      %s45 = int_to_ptr.vmem [resolvable:$true] %s44
      %50 = dma.hbm_to_vmem [thread:$0]  %s2, 2048, %s45, [#allocation7], 256, 256, 16
    $region13: #{tpu_custom_call.1} parent=1 // pred_fallthru
      _
    // Predicated region
    $region14: #{tpu_custom_call.1} parent=1 // pred_check
      _
    $region15: #{tpu_custom_call.1} parent=1 // pred_check_branch
      %52 = sbr.rel (0) target = $region17
    $region16: #{tpu_custom_call.1} parent=1 // pred_region
      _
    $region17: #{tpu_custom_call.1} parent=1 // pred_fallthru
      _
    // Predicated region
    $region18: #{tpu_custom_call.1} parent=1 // pred_check
      _
    $region19: #{tpu_custom_call.1} parent=1 // pred_check_branch
      %54 = sbr.rel (0) target = $region21
    $region20: #{tpu_custom_call.1} parent=1 // pred_region
      %55 = dma.done [#allocation4], 1024
    $region21: #{tpu_custom_call.1} parent=1 // pred_fallthru
      _
    // Predicated region
    $region22: #{tpu_custom_call.1} parent=1 // pred_check
      _
    $region23: #{tpu_custom_call.1} parent=1 // pred_check_branch
      %57 = sbr.rel (0) target = $region25
    $region24: #{tpu_custom_call.1} parent=1 // pred_region
      %58 = dma.done [#allocation7], 512
    $region25: #{tpu_custom_call.1} parent=1 // pred_fallthru
      _
    // Predicated region
    $region26: #{tpu_custom_call.1} parent=1 // pred_check
      _
    $region27: #{tpu_custom_call.1} parent=1 // pred_check_branch
      %60 = sbr.rel (0) target = $region29
    $region28: #{tpu_custom_call.1} parent=1 // pred_region
      %61 = dma.done [#allocation7], 2048
    $region29: #{tpu_custom_call.1} parent=1 // pred_fallthru
      _
    %v62 = vld [vmem:[#allocation3] sm:$0xff]
    %v63 = vld [vmem:[#allocation3 + $0x8] sm:$0xff]
    %v64 = vld [vmem:[#allocation3 + $0x10] sm:$0xff]
    %v65 = vld [vmem:[#allocation3 + $0x18] sm:$0xff]
    %v66 = vld [vmem:[#allocation3 + $0x20] sm:$0xff]
    %v67 = vld [vmem:[#allocation3 + $0x28] sm:$0xff]
    %v68 = vld [vmem:[#allocation3 + $0x30] sm:$0xff]
    %v69 = vld [vmem:[#allocation3 + $0x38] sm:$0xff]
    %v70 = vld [vmem:[#allocation6] sm:$0xff]
    %v71 = vld [vmem:[#allocation6 + $0x8] sm:$0xff]
    %v72 = vld [vmem:[#allocation6 + $0x10] sm:$0xff]
    %v73 = vld [vmem:[#allocation6 + $0x18] sm:$0xff]
    %v74 = vld [vmem:[%s3] sm:$0x3]
    %v76 = vlaneseq
    %v77 = vshrl.u32 %v76, 7
    %v78 = vsub.s32 0, %v77
    %v79 = vrot.slane %v74, %v78
    %v80 = vlaneseq
    %v81 = vshrl.u32 %v80, 7
    %v82 = vsub.s32 1, %v81
    %v83 = vrot.slane %v74, %v82
    %vm86 = vcmask 130048
    %v88 = vsel %vm86, %v62, 0
    %v91 = vsel %vm86, %v63, 0
    %v94 = vsel %vm86, %v64, 0
    %v97 = vsel %vm86, %v65, 0
    %v100 = vsel %vm86, %v66, 0
    %v103 = vsel %vm86, %v67, 0
    %v106 = vsel %vm86, %v68, 0
    %v109 = vsel %vm86, %v69, 0
    %111 = vmatprep.subr.mxu0 %v71
    %112 = vmatpush1.msra.mxu0 %v70
    %113 = vmatprep.subr.mxu0 %v73
    %114 = vmatpush1.msra.mxu0 %v72
    %115 = vmatprep.subr.mxu0 0.0
    %116 = vmatpush1.msra.mxu0 0.0
    %117 = vmatprep.subr.mxu0 0.0
    %118 = vmatpush1.msra.mxu0 0.0
    %119 = vmatprep.subr.mxu0 0.0
    %120 = vmatpush1.msra.mxu0 0.0
    %121 = vmatprep.subr.mxu0 0.0
    %122 = vmatpush1.msra.mxu0 0.0
    %123 = vmatprep.subr.mxu0 0.0
    %124 = vmatpush1.msra.mxu0 0.0
    %125 = vmatprep.subr.mxu0 0.0
    %126 = vmatpush1.msra.mxu0 0.0
    %127 = vmatprep.subr.mxu0 0.0
    %128 = vmatpush1.msra.mxu0 0.0
    %129 = vmatprep.subr.mxu0 0.0
    %130 = vmatpush1.msra.mxu0 0.0
    %131 = vmatprep.subr.mxu0 0.0
    %132 = vmatpush1.msra.mxu0 0.0
    %133 = vmatprep.subr.mxu0 0.0
    %134 = vmatpush1.msra.mxu0 0.0
    %135 = vmatprep.subr.mxu0 0.0
    %136 = vmatpush1.msra.mxu0 0.0
    %137 = vmatprep.subr.mxu0 0.0
    %138 = vmatpush1.msra.mxu0 0.0
    %139 = vmatprep.subr.mxu0 0.0
    %140 = vmatpush1.msra.mxu0 0.0
    %141 = vmatprep.subr.mxu0 0.0
    %142 = vmatpush1.msra.mxu0 0.0
    %143 = vmatprep.subr.mxu0 0.0
    %144 = vmatpush1.msra.mxu0 0.0
    %145 = vmatprep.subr.mxu0 0.0
    %146 = vmatpush1.msra.mxu0 0.0
    %147 = vmatprep.subr.mxu0 0.0
    %148 = vmatpush1.msra.mxu0 0.0
    %149 = vmatprep.subr.mxu0 0.0
    %150 = vmatpush1.msra.mxu0 0.0
    %151 = vmatprep.subr.mxu0 0.0
    %152 = vmatpush1.msra.mxu0 0.0
    %153 = vmatprep.subr.mxu0 0.0
    %154 = vmatpush1.msra.mxu0 0.0
    %155 = vmatprep.subr.mxu0 0.0
    %156 = vmatpush1.msra.mxu0 0.0
    %157 = vmatprep.subr.mxu0 0.0
    %158 = vmatpush1.msra.mxu0 0.0
    %159 = vmatprep.subr.mxu0 0.0
    %160 = vmatpush1.msra.mxu0 0.0
    %161 = vmatprep.subr.mxu0 0.0
    %162 = vmatpush1.msra.mxu0 0.0
    %163 = vmatprep.subr.mxu0 0.0
    %164 = vmatpush1.msra.mxu0 0.0
    %165 = vmatprep.subr.mxu0 0.0
    %166 = vmatpush1.msra.mxu0 0.0
    %167 = vmatprep.subr.mxu0 0.0
    %168 = vmatpush1.msra.mxu0 0.0
    %169 = vmatprep.subr.mxu0 0.0
    %170 = vmatpush1.msra.mxu0 0.0
    %171 = vmatprep.subr.mxu0 0.0
    %172 = vmatpush1.msra.mxu0 0.0
    %173 = vmatprep.subr.mxu0 0.0
    %174 = vmatpush1.msra.mxu0 0.0
    %175 = vmatprep.mubr.f32.mxu0 0.0
    %176 = vmatmul.mubr.f32.gmra.mrb[0].mxu0 %v88
    %v177 = vpop.f32.mrb[0].mxu0
    %v178 = vadd.f32 %v79, %v177
    %v179 = vpop.f32.mrb[0].mxu0
    %v180 = vadd.f32 %v83, %v179
    %181 = vmatprep.mubr.f32.mxu0 0.0
    %182 = vmatmul.mubr.f32.gmra.mrb[0].mxu0 %v91
    %v183 = vpop.f32.mrb[0].mxu0
    %v184 = vadd.f32 %v79, %v183
    %v185 = vpop.f32.mrb[0].mxu0
    %v186 = vadd.f32 %v83, %v185
    %187 = vmatprep.mubr.f32.mxu0 0.0
    %188 = vmatmul.mubr.f32.gmra.mrb[0].mxu0 %v94
    %v189 = vpop.f32.mrb[0].mxu0
    %v190 = vadd.f32 %v79, %v189
    %v191 = vpop.f32.mrb[0].mxu0
    %v192 = vadd.f32 %v83, %v191
    %193 = vmatprep.mubr.f32.mxu0 0.0
    %194 = vmatmul.mubr.f32.gmra.mrb[0].mxu0 %v97
    %v195 = vpop.f32.mrb[0].mxu0
    %v196 = vadd.f32 %v79, %v195
    %v197 = vpop.f32.mrb[0].mxu0
    %v198 = vadd.f32 %v83, %v197
    %199 = vmatprep.mubr.f32.mxu0 0.0
    %200 = vmatmul.mubr.f32.gmra.mrb[0].mxu0 %v100
    %v201 = vpop.f32.mrb[0].mxu0
    %v202 = vadd.f32 %v79, %v201
    %v203 = vpop.f32.mrb[0].mxu0
    %v204 = vadd.f32 %v83, %v203
    %205 = vmatprep.mubr.f32.mxu0 0.0
    %206 = vmatmul.mubr.f32.gmra.mrb[0].mxu0 %v103
    %v207 = vpop.f32.mrb[0].mxu0
    %v208 = vadd.f32 %v79, %v207
    %v209 = vpop.f32.mrb[0].mxu0
    %v210 = vadd.f32 %v83, %v209
    %211 = vmatprep.mubr.f32.mxu0 0.0
    %212 = vmatmul.mubr.f32.gmra.mrb[0].mxu0 %v106
    %v213 = vpop.f32.mrb[0].mxu0
    %v214 = vadd.f32 %v79, %v213
    %v215 = vpop.f32.mrb[0].mxu0
    %v216 = vadd.f32 %v83, %v215
    %217 = vmatprep.mubr.f32.mxu0 0.0
    %218 = vmatmul.mubr.f32.gmra.mrb[0].mxu0 %v109
    %v219 = vpop.f32.mrb[0].mxu0
    %v220 = vadd.f32 %v79, %v219
    %v221 = vpop.f32.mrb[0].mxu0
    %v222 = vadd.f32 %v83, %v221
    %223 = vdwg.mxu0
    %224 = vst [vmem:[#allocation2] sm:$0xff] %v178
    %225 = vst [vmem:[#allocation2 + $0x8] sm:$0xff] %v180
    %226 = vst [vmem:[#allocation2 + $0x10] sm:$0xff] %v184
    %227 = vst [vmem:[#allocation2 + $0x18] sm:$0xff] %v186
    %228 = vst [vmem:[#allocation2 + $0x20] sm:$0xff] %v190
    %229 = vst [vmem:[#allocation2 + $0x28] sm:$0xff] %v192
    %230 = vst [vmem:[#allocation2 + $0x30] sm:$0xff] %v196
    %231 = vst [vmem:[#allocation2 + $0x38] sm:$0xff] %v198
    %232 = vst [vmem:[#allocation2 + $0x40] sm:$0xff] %v202
    %233 = vst [vmem:[#allocation2 + $0x48] sm:$0xff] %v204
    %234 = vst [vmem:[#allocation2 + $0x50] sm:$0xff] %v208
    %235 = vst [vmem:[#allocation2 + $0x58] sm:$0xff] %v210
    %236 = vst [vmem:[#allocation2 + $0x60] sm:$0xff] %v214
    %237 = vst [vmem:[#allocation2 + $0x68] sm:$0xff] %v216
    %238 = vst [vmem:[#allocation2 + $0x70] sm:$0xff] %v220
    %239 = vst [vmem:[#allocation2 + $0x78] sm:$0xff] %v222
    %v240 = vld [vmem:[#allocation8] sm:$0xff]
    %v241 = vld [vmem:[#allocation8 + $0x8] sm:$0xff]
    %v242 = vld [vmem:[#allocation8 + $0x10] sm:$0xff]
    %v243 = vld [vmem:[#allocation8 + $0x18] sm:$0xff]
    %v244 = vld [vmem:[#allocation8 + $0x20] sm:$0xff]
    %v245 = vld [vmem:[#allocation8 + $0x28] sm:$0xff]
    %v246 = vld [vmem:[#allocation8 + $0x30] sm:$0xff]
    %v247 = vld [vmem:[#allocation8 + $0x38] sm:$0xff]
    %v248 = vld [vmem:[#allocation8 + $0x40] sm:$0xff]
    %v249 = vld [vmem:[#allocation8 + $0x48] sm:$0xff]
    %v250 = vld [vmem:[#allocation8 + $0x50] sm:$0xff]
    %v251 = vld [vmem:[#allocation8 + $0x58] sm:$0xff]
    %v252 = vld [vmem:[#allocation8 + $0x60] sm:$0xff]
    %v253 = vld [vmem:[#allocation8 + $0x68] sm:$0xff]
    %v254 = vld [vmem:[#allocation8 + $0x70] sm:$0xff]
    %v255 = vld [vmem:[#allocation8 + $0x78] sm:$0xff]
    %v256 = vld [vmem:[#allocation2] sm:$0xff]
    %v257 = vld [vmem:[#allocation2 + $0x8] sm:$0xff]
    %vm258 = vcmask 523264
    %v260 = vsel %vm258, 0.0, 0
    %262 = vmatprep.subr.mxu0 %v241
    %263 = vmatpush1.msra.mxu0 %v240
    %264 = vmatprep.subr.mxu0 %v243
    %265 = vmatpush1.msra.mxu0 %v242
    %266 = vmatprep.subr.mxu0 %v245
    %267 = vmatpush1.msra.mxu0 %v244
    %268 = vmatprep.subr.mxu0 %v247
    %269 = vmatpush1.msra.mxu0 %v246
    %270 = vmatprep.subr.mxu0 %v249
    %271 = vmatpush1.msra.mxu0 %v248
    %272 = vmatprep.subr.mxu0 %v251
    %273 = vmatpush1.msra.mxu0 %v250
    %274 = vmatprep.subr.mxu0 %v253
    %275 = vmatpush1.msra.mxu0 %v252
    %276 = vmatprep.subr.mxu0 %v255
    %277 = vmatpush1.msra.mxu0 %v254
    %278 = vmatprep.subr.mxu0 0.0
    %279 = vmatpush1.msra.mxu0 0.0
    %280 = vmatprep.subr.mxu0 0.0
    %281 = vmatpush1.msra.mxu0 0.0
    %282 = vmatprep.subr.mxu0 0.0
    %283 = vmatpush1.msra.mxu0 0.0
    %284 = vmatprep.subr.mxu0 0.0
    %285 = vmatpush1.msra.mxu0 0.0
    %286 = vmatprep.subr.mxu0 0.0
    %287 = vmatpush1.msra.mxu0 0.0
    %288 = vmatprep.subr.mxu0 0.0
    %289 = vmatpush1.msra.mxu0 0.0
    %290 = vmatprep.subr.mxu0 0.0
    %291 = vmatpush1.msra.mxu0 0.0
    %292 = vmatprep.subr.mxu0 0.0
    %293 = vmatpush1.msra.mxu0 0.0
    %294 = vmatprep.subr.mxu0 0.0
    %295 = vmatpush1.msra.mxu0 0.0
    %296 = vmatprep.subr.mxu0 0.0
    %297 = vmatpush1.msra.mxu0 0.0
    %298 = vmatprep.subr.mxu0 0.0
    %299 = vmatpush1.msra.mxu0 0.0
    %300 = vmatprep.subr.mxu0 0.0
    %301 = vmatpush1.msra.mxu0 0.0
    %302 = vmatprep.subr.mxu0 0.0
    %303 = vmatpush1.msra.mxu0 0.0
    %304 = vmatprep.subr.mxu0 0.0
    %305 = vmatpush1.msra.mxu0 0.0
    %306 = vmatprep.subr.mxu0 0.0
    %307 = vmatpush1.msra.mxu0 0.0
    %308 = vmatprep.subr.mxu0 0.0
    %309 = vmatpush1.msra.mxu0 0.0
    %310 = vmatprep.subr.mxu0 0.0
    %311 = vmatpush1.msra.mxu0 0.0
    %312 = vmatprep.subr.mxu0 0.0
    %313 = vmatpush1.msra.mxu0 0.0
    %314 = vmatprep.subr.mxu0 0.0
    %315 = vmatpush1.msra.mxu0 0.0
    %316 = vmatprep.subr.mxu0 0.0
    %317 = vmatpush1.msra.mxu0 0.0
    %318 = vmatprep.subr.mxu0 0.0
    %319 = vmatpush1.msra.mxu0 0.0
    %320 = vmatprep.subr.mxu0 0.0
    %321 = vmatpush1.msra.mxu0 0.0
    %322 = vmatprep.subr.mxu0 0.0
    %323 = vmatpush1.msra.mxu0 0.0
    %324 = vmatprep.subr.mxu0 0.0
    %325 = vmatpush1.msra.mxu0 0.0
    %326 = vmatprep.mubr.f32.mxu0 0.0
    %327 = vmatmul.mubr.f32.gmra.mrb[0].mxu0 %v260
    %v328 = vpop.f32.mrb[0].mxu0
    %v329 = vadd.f32 0.0, %v328
    %v330 = vpop.f32.mrb[0].mxu0
    %v331 = vadd.f32 0.0, %v330
    %332 = vdwg.mxu0
    %v333 = vadd.f32 %v256, %v329
    %v334 = vadd.f32 %v257, %v331
    %v335 = vxor.u32 %v333, 2147483648
    %v336 = vmul.f32 %v335, 1.442695
    %v337 = vpow.pop %v336
    %v338 = vadd.f32 %v337, 1.0
    %v339 = vrcp.pop %v338
    %v340 = vmul.f32 1.0, %v339
    %v341 = vtanh.pop %v334
    %v342 = vxor.u32 %v334, 2147483648
    %v343 = vmul.f32 %v342, 1.442695
    %v344 = vpow.pop %v343
    %v345 = vadd.f32 %v344, 1.0
    %v346 = vrcp.pop %v345
    %v347 = vmul.f32 1.0, %v346
    %v348 = vmul.f32 %v340, 0.0
    %v349 = vmul.f32 %v340, %v341
    %351 = vrot.lane.b32.xlu0 %v349, 64
    %v352 = vpop.permute.xlu0 %351
    %v354 = vadd.f32 %v348, %v352
    %v355 = vtanh.pop %v354
    %v356 = vmul.f32 %v347, %v355
    %s357 = scalar_lea.vmem [#allocation2], 16
    %v358 = vld [vmem:[%s357] sm:$0xff]
    %v359 = vld [vmem:[%s357 + $0x8] sm:$0xff]
    %361 = vrot.lane.b32.xlu0 %v356, 64
    %v362 = vpop.permute.xlu0 %361
    %v363 = vsel %vm258, %v362, 0
    %365 = vmatprep.subr.mxu0 %v241
    %366 = vmatpush1.msra.mxu0 %v240
    %367 = vmatprep.subr.mxu0 %v243
    %368 = vmatpush1.msra.mxu0 %v242
    %369 = vmatprep.subr.mxu0 %v245
    %370 = vmatpush1.msra.mxu0 %v244
    %371 = vmatprep.subr.mxu0 %v247
    %372 = vmatpush1.msra.mxu0 %v246
    %373 = vmatprep.subr.mxu0 %v249
    %374 = vmatpush1.msra.mxu0 %v248
    %375 = vmatprep.subr.mxu0 %v251
    %376 = vmatpush1.msra.mxu0 %v250
    %377 = vmatprep.subr.mxu0 %v253
    %378 = vmatpush1.msra.mxu0 %v252
    %379 = vmatprep.subr.mxu0 %v255
    %380 = vmatpush1.msra.mxu0 %v254
    %381 = vmatprep.subr.mxu0 0.0
    %382 = vmatpush1.msra.mxu0 0.0
    %383 = vmatprep.subr.mxu0 0.0
    %384 = vmatpush1.msra.mxu0 0.0
    %385 = vmatprep.subr.mxu0 0.0
    %386 = vmatpush1.msra.mxu0 0.0
    %387 = vmatprep.subr.mxu0 0.0
    %388 = vmatpush1.msra.mxu0 0.0
    %389 = vmatprep.subr.mxu0 0.0
    %390 = vmatpush1.msra.mxu0 0.0
    %391 = vmatprep.subr.mxu0 0.0
    %392 = vmatpush1.msra.mxu0 0.0
    %393 = vmatprep.subr.mxu0 0.0
    %394 = vmatpush1.msra.mxu0 0.0
    %395 = vmatprep.subr.mxu0 0.0
    %396 = vmatpush1.msra.mxu0 0.0
    %397 = vmatprep.subr.mxu0 0.0
    %398 = vmatpush1.msra.mxu0 0.0
    %399 = vmatprep.subr.mxu0 0.0
    %400 = vmatpush1.msra.mxu0 0.0
    %401 = vmatprep.subr.mxu0 0.0
    %402 = vmatpush1.msra.mxu0 0.0
    %403 = vmatprep.subr.mxu0 0.0
    %404 = vmatpush1.msra.mxu0 0.0
    %405 = vmatprep.subr.mxu0 0.0
    %406 = vmatpush1.msra.mxu0 0.0
    %407 = vmatprep.subr.mxu0 0.0
    %408 = vmatpush1.msra.mxu0 0.0
    %409 = vmatprep.subr.mxu0 0.0
    %410 = vmatpush1.msra.mxu0 0.0
    %411 = vmatprep.subr.mxu0 0.0
    %412 = vmatpush1.msra.mxu0 0.0
    %413 = vmatprep.subr.mxu0 0.0
    %414 = vmatpush1.msra.mxu0 0.0
    %415 = vmatprep.subr.mxu0 0.0
    %416 = vmatpush1.msra.mxu0 0.0
    %417 = vmatprep.subr.mxu0 0.0
    %418 = vmatpush1.msra.mxu0 0.0
    %419 = vmatprep.subr.mxu0 0.0
    %420 = vmatpush1.msra.mxu0 0.0
    %421 = vmatprep.subr.mxu0 0.0
    %422 = vmatpush1.msra.mxu0 0.0
    %423 = vmatprep.subr.mxu0 0.0
    %424 = vmatpush1.msra.mxu0 0.0
    %425 = vmatprep.subr.mxu0 0.0
    %426 = vmatpush1.msra.mxu0 0.0
    %427 = vmatprep.subr.mxu0 0.0
    %428 = vmatpush1.msra.mxu0 0.0
    %429 = vmatprep.mubr.f32.mxu0 0.0
    %430 = vmatmul.mubr.f32.gmra.mrb[0].mxu0 %v363
    %v431 = vpop.f32.mrb[0].mxu0
    %v432 = vadd.f32 0.0, %v431
    %v433 = vpop.f32.mrb[0].mxu0
    %v434 = vadd.f32 0.0, %v433
    %435 = vdwg.mxu0
    %v436 = vadd.f32 %v358, %v432
    %v437 = vadd.f32 %v359, %v434
    %v438 = vxor.u32 %v436, 2147483648
    %v439 = vmul.f32 %v438, 1.442695
    %v440 = vpow.pop %v439
    %v441 = vadd.f32 %v440, 1.0
    %v442 = vrcp.pop %v441
    %v443 = vmul.f32 1.0, %v442
    %v444 = vtanh.pop %v437
    %v445 = vxor.u32 %v437, 2147483648
    %v446 = vmul.f32 %v445, 1.442695
    %v447 = vpow.pop %v446
    %v448 = vadd.f32 %v447, 1.0
    %v449 = vrcp.pop %v448
    %v450 = vmul.f32 1.0, %v449
    %v451 = vmul.f32 %v443, %v354
    %v452 = vmul.f32 %v443, %v444
    %454 = vrot.lane.b32.xlu0 %v452, 64
    %v455 = vpop.permute.xlu0 %454
    %v457 = vadd.f32 %v451, %v455
    %v458 = vtanh.pop %v457
    %v459 = vmul.f32 %v450, %v458
    %s460 = scalar_lea.vmem [#allocation2], 32
    %v461 = vld [vmem:[%s460] sm:$0xff]
    %v462 = vld [vmem:[%s460 + $0x8] sm:$0xff]
    %464 = vrot.lane.b32.xlu0 %v459, 64
    %v465 = vpop.permute.xlu0 %464
    %v466 = vsel %vm258, %v465, 0
    %468 = vmatprep.subr.mxu0 %v241
    %469 = vmatpush1.msra.mxu0 %v240
    %470 = vmatprep.subr.mxu0 %v243
    %471 = vmatpush1.msra.mxu0 %v242
    %472 = vmatprep.subr.mxu0 %v245
    %473 = vmatpush1.msra.mxu0 %v244
    %474 = vmatprep.subr.mxu0 %v247
    %475 = vmatpush1.msra.mxu0 %v246
    %476 = vmatprep.subr.mxu0 %v249
    %477 = vmatpush1.msra.mxu0 %v248
    %478 = vmatprep.subr.mxu0 %v251
    %479 = vmatpush1.msra.mxu0 %v250
    %480 = vmatprep.subr.mxu0 %v253
    %481 = vmatpush1.msra.mxu0 %v252
    %482 = vmatprep.subr.mxu0 %v255
    %483 = vmatpush1.msra.mxu0 %v254
    %484 = vmatprep.subr.mxu0 0.0
    %485 = vmatpush1.msra.mxu0 0.0
    %486 = vmatprep.subr.mxu0 0.0
    %487 = vmatpush1.msra.mxu0 0.0
    %488 = vmatprep.subr.mxu0 0.0
    %489 = vmatpush1.msra.mxu0 0.0
    %490 = vmatprep.subr.mxu0 0.0
    %491 = vmatpush1.msra.mxu0 0.0
    %492 = vmatprep.subr.mxu0 0.0
    %493 = vmatpush1.msra.mxu0 0.0
    %494 = vmatprep.subr.mxu0 0.0
    %495 = vmatpush1.msra.mxu0 0.0
    %496 = vmatprep.subr.mxu0 0.0
    %497 = vmatpush1.msra.mxu0 0.0
    %498 = vmatprep.subr.mxu0 0.0
    %499 = vmatpush1.msra.mxu0 0.0
    %500 = vmatprep.subr.mxu0 0.0
    %501 = vmatpush1.msra.mxu0 0.0
    %502 = vmatprep.subr.mxu0 0.0
    %503 = vmatpush1.msra.mxu0 0.0
    %504 = vmatprep.subr.mxu0 0.0
    %505 = vmatpush1.msra.mxu0 0.0
    %506 = vmatprep.subr.mxu0 0.0
    %507 = vmatpush1.msra.mxu0 0.0
    %508 = vmatprep.subr.mxu0 0.0
    %509 = vmatpush1.msra.mxu0 0.0
    %510 = vmatprep.subr.mxu0 0.0
    %511 = vmatpush1.msra.mxu0 0.0
    %512 = vmatprep.subr.mxu0 0.0
    %513 = vmatpush1.msra.mxu0 0.0
    %514 = vmatprep.subr.mxu0 0.0
    %515 = vmatpush1.msra.mxu0 0.0
    %516 = vmatprep.subr.mxu0 0.0
    %517 = vmatpush1.msra.mxu0 0.0
    %518 = vmatprep.subr.mxu0 0.0
    %519 = vmatpush1.msra.mxu0 0.0
    %520 = vmatprep.subr.mxu0 0.0
    %521 = vmatpush1.msra.mxu0 0.0
    %522 = vmatprep.subr.mxu0 0.0
    %523 = vmatpush1.msra.mxu0 0.0
    %524 = vmatprep.subr.mxu0 0.0
    %525 = vmatpush1.msra.mxu0 0.0
    %526 = vmatprep.subr.mxu0 0.0
    %527 = vmatpush1.msra.mxu0 0.0
    %528 = vmatprep.subr.mxu0 0.0
    %529 = vmatpush1.msra.mxu0 0.0
    %530 = vmatprep.subr.mxu0 0.0
    %531 = vmatpush1.msra.mxu0 0.0
    %532 = vmatprep.mubr.f32.mxu0 0.0
    %533 = vmatmul.mubr.f32.gmra.mrb[0].mxu0 %v466
    %v534 = vpop.f32.mrb[0].mxu0
    %v535 = vadd.f32 0.0, %v534
    %v536 = vpop.f32.mrb[0].mxu0
    %v537 = vadd.f32 0.0, %v536
    %538 = vdwg.mxu0
    %v539 = vadd.f32 %v461, %v535
    %v540 = vadd.f32 %v462, %v537
    %v541 = vxor.u32 %v539, 2147483648
    %v542 = vmul.f32 %v541, 1.442695
    %v543 = vpow.pop %v542
    %v544 = vadd.f32 %v543, 1.0
    %v545 = vrcp.pop %v544
    %v546 = vmul.f32 1.0, %v545
    %v547 = vtanh.pop %v540
    %v548 = vxor.u32 %v540, 2147483648
    %v549 = vmul.f32 %v548, 1.442695
    %v550 = vpow.pop %v549
    %v551 = vadd.f32 %v550, 1.0
    %v552 = vrcp.pop %v551
    %v553 = vmul.f32 1.0, %v552
    %v554 = vmul.f32 %v546, %v457
    %v555 = vmul.f32 %v546, %v547
    %557 = vrot.lane.b32.xlu0 %v555, 64
    %v558 = vpop.permute.xlu0 %557
    %v560 = vadd.f32 %v554, %v558
    %v561 = vtanh.pop %v560
    %v562 = vmul.f32 %v553, %v561
    %s563 = scalar_lea.vmem [#allocation2], 48
    %v564 = vld [vmem:[%s563] sm:$0xff]
    %v565 = vld [vmem:[%s563 + $0x8] sm:$0xff]
    %567 = vrot.lane.b32.xlu0 %v562, 64
    %v568 = vpop.permute.xlu0 %567
    %v569 = vsel %vm258, %v568, 0
    %571 = vmatprep.subr.mxu0 %v241
    %572 = vmatpush1.msra.mxu0 %v240
    %573 = vmatprep.subr.mxu0 %v243
    %574 = vmatpush1.msra.mxu0 %v242
    %575 = vmatprep.subr.mxu0 %v245
    %576 = vmatpush1.msra.mxu0 %v244
    %577 = vmatprep.subr.mxu0 %v247
    %578 = vmatpush1.msra.mxu0 %v246
    %579 = vmatprep.subr.mxu0 %v249
    %580 = vmatpush1.msra.mxu0 %v248
    %581 = vmatprep.subr.mxu0 %v251
    %582 = vmatpush1.msra.mxu0 %v250
    %583 = vmatprep.subr.mxu0 %v253
    %584 = vmatpush1.msra.mxu0 %v252
    %585 = vmatprep.subr.mxu0 %v255
    %586 = vmatpush1.msra.mxu0 %v254
    %587 = vmatprep.subr.mxu0 0.0
    %588 = vmatpush1.msra.mxu0 0.0
    %589 = vmatprep.subr.mxu0 0.0
    %590 = vmatpush1.msra.mxu0 0.0
    %591 = vmatprep.subr.mxu0 0.0
    %592 = vmatpush1.msra.mxu0 0.0
    %593 = vmatprep.subr.mxu0 0.0
    %594 = vmatpush1.msra.mxu0 0.0
    %595 = vmatprep.subr.mxu0 0.0
    %596 = vmatpush1.msra.mxu0 0.0
    %597 = vmatprep.subr.mxu0 0.0
    %598 = vmatpush1.msra.mxu0 0.0
    %599 = vmatprep.subr.mxu0 0.0
    %600 = vmatpush1.msra.mxu0 0.0
    %601 = vmatprep.subr.mxu0 0.0
    %602 = vmatpush1.msra.mxu0 0.0
    %603 = vmatprep.subr.mxu0 0.0
    %604 = vmatpush1.msra.mxu0 0.0
    %605 = vmatprep.subr.mxu0 0.0
    %606 = vmatpush1.msra.mxu0 0.0
    %607 = vmatprep.subr.mxu0 0.0
    %608 = vmatpush1.msra.mxu0 0.0
    %609 = vmatprep.subr.mxu0 0.0
    %610 = vmatpush1.msra.mxu0 0.0
    %611 = vmatprep.subr.mxu0 0.0
    %612 = vmatpush1.msra.mxu0 0.0
    %613 = vmatprep.subr.mxu0 0.0
    %614 = vmatpush1.msra.mxu0 0.0
    %615 = vmatprep.subr.mxu0 0.0
    %616 = vmatpush1.msra.mxu0 0.0
    %617 = vmatprep.subr.mxu0 0.0
    %618 = vmatpush1.msra.mxu0 0.0
    %619 = vmatprep.subr.mxu0 0.0
    %620 = vmatpush1.msra.mxu0 0.0
    %621 = vmatprep.subr.mxu0 0.0
    %622 = vmatpush1.msra.mxu0 0.0
    %623 = vmatprep.subr.mxu0 0.0
    %624 = vmatpush1.msra.mxu0 0.0
    %625 = vmatprep.subr.mxu0 0.0
    %626 = vmatpush1.msra.mxu0 0.0
    %627 = vmatprep.subr.mxu0 0.0
    %628 = vmatpush1.msra.mxu0 0.0
    %629 = vmatprep.subr.mxu0 0.0
    %630 = vmatpush1.msra.mxu0 0.0
    %631 = vmatprep.subr.mxu0 0.0
    %632 = vmatpush1.msra.mxu0 0.0
    %633 = vmatprep.subr.mxu0 0.0
    %634 = vmatpush1.msra.mxu0 0.0
    %635 = vmatprep.mubr.f32.mxu0 0.0
    %636 = vmatmul.mubr.f32.gmra.mrb[0].mxu0 %v569
    %v637 = vpop.f32.mrb[0].mxu0
    %v638 = vadd.f32 0.0, %v637
    %v639 = vpop.f32.mrb[0].mxu0
    %v640 = vadd.f32 0.0, %v639
    %641 = vdwg.mxu0
    %v642 = vadd.f32 %v564, %v638
    %v643 = vadd.f32 %v565, %v640
    %v644 = vxor.u32 %v642, 2147483648
    %v645 = vmul.f32 %v644, 1.442695
    %v646 = vpow.pop %v645
    %v647 = vadd.f32 %v646, 1.0
    %v648 = vrcp.pop %v647
    %v649 = vmul.f32 1.0, %v648
    %v650 = vtanh.pop %v643
    %v651 = vxor.u32 %v643, 2147483648
    %v652 = vmul.f32 %v651, 1.442695
    %v653 = vpow.pop %v652
    %v654 = vadd.f32 %v653, 1.0
    %v655 = vrcp.pop %v654
    %v656 = vmul.f32 1.0, %v655
    %v657 = vmul.f32 %v649, %v560
    %v658 = vmul.f32 %v649, %v650
    %660 = vrot.lane.b32.xlu0 %v658, 64
    %v661 = vpop.permute.xlu0 %660
    %v663 = vadd.f32 %v657, %v661
    %v664 = vtanh.pop %v663
    %v665 = vmul.f32 %v656, %v664
    %s666 = scalar_lea.vmem [#allocation2], 64
    %v667 = vld [vmem:[%s666] sm:$0xff]
    %v668 = vld [vmem:[%s666 + $0x8] sm:$0xff]
    %670 = vrot.lane.b32.xlu0 %v665, 64
    %v671 = vpop.permute.xlu0 %670
    %v672 = vsel %vm258, %v671, 0
    %674 = vmatprep.subr.mxu0 %v241
    %675 = vmatpush1.msra.mxu0 %v240
    %676 = vmatprep.subr.mxu0 %v243
    %677 = vmatpush1.msra.mxu0 %v242
    %678 = vmatprep.subr.mxu0 %v245
    %679 = vmatpush1.msra.mxu0 %v244
    %680 = vmatprep.subr.mxu0 %v247
    %681 = vmatpush1.msra.mxu0 %v246
    %682 = vmatprep.subr.mxu0 %v249
    %683 = vmatpush1.msra.mxu0 %v248
    %684 = vmatprep.subr.mxu0 %v251
    %685 = vmatpush1.msra.mxu0 %v250
    %686 = vmatprep.subr.mxu0 %v253
    %687 = vmatpush1.msra.mxu0 %v252
    %688 = vmatprep.subr.mxu0 %v255
    %689 = vmatpush1.msra.mxu0 %v254
    %690 = vmatprep.subr.mxu0 0.0
    %691 = vmatpush1.msra.mxu0 0.0
    %692 = vmatprep.subr.mxu0 0.0
    %693 = vmatpush1.msra.mxu0 0.0
    %694 = vmatprep.subr.mxu0 0.0
    %695 = vmatpush1.msra.mxu0 0.0
    %696 = vmatprep.subr.mxu0 0.0
    %697 = vmatpush1.msra.mxu0 0.0
    %698 = vmatprep.subr.mxu0 0.0
    %699 = vmatpush1.msra.mxu0 0.0
    %700 = vmatprep.subr.mxu0 0.0
    %701 = vmatpush1.msra.mxu0 0.0
    %702 = vmatprep.subr.mxu0 0.0
    %703 = vmatpush1.msra.mxu0 0.0
    %704 = vmatprep.subr.mxu0 0.0
    %705 = vmatpush1.msra.mxu0 0.0
    %706 = vmatprep.subr.mxu0 0.0
    %707 = vmatpush1.msra.mxu0 0.0
    %708 = vmatprep.subr.mxu0 0.0
    %709 = vmatpush1.msra.mxu0 0.0
    %710 = vmatprep.subr.mxu0 0.0
    %711 = vmatpush1.msra.mxu0 0.0
    %712 = vmatprep.subr.mxu0 0.0
    %713 = vmatpush1.msra.mxu0 0.0
    %714 = vmatprep.subr.mxu0 0.0
    %715 = vmatpush1.msra.mxu0 0.0
    %716 = vmatprep.subr.mxu0 0.0
    %717 = vmatpush1.msra.mxu0 0.0
    %718 = vmatprep.subr.mxu0 0.0
    %719 = vmatpush1.msra.mxu0 0.0
    %720 = vmatprep.subr.mxu0 0.0
    %721 = vmatpush1.msra.mxu0 0.0
    %722 = vmatprep.subr.mxu0 0.0
    %723 = vmatpush1.msra.mxu0 0.0
    %724 = vmatprep.subr.mxu0 0.0
    %725 = vmatpush1.msra.mxu0 0.0
    %726 = vmatprep.subr.mxu0 0.0
    %727 = vmatpush1.msra.mxu0 0.0
    %728 = vmatprep.subr.mxu0 0.0
    %729 = vmatpush1.msra.mxu0 0.0
    %730 = vmatprep.subr.mxu0 0.0
    %731 = vmatpush1.msra.mxu0 0.0
    %732 = vmatprep.subr.mxu0 0.0
    %733 = vmatpush1.msra.mxu0 0.0
    %734 = vmatprep.subr.mxu0 0.0
    %735 = vmatpush1.msra.mxu0 0.0
    %736 = vmatprep.subr.mxu0 0.0
    %737 = vmatpush1.msra.mxu0 0.0
    %738 = vmatprep.mubr.f32.mxu0 0.0
    %739 = vmatmul.mubr.f32.gmra.mrb[0].mxu0 %v672
    %v740 = vpop.f32.mrb[0].mxu0
    %v741 = vadd.f32 0.0, %v740
    %v742 = vpop.f32.mrb[0].mxu0
    %v743 = vadd.f32 0.0, %v742
    %744 = vdwg.mxu0
    %v745 = vadd.f32 %v667, %v741
    %v746 = vadd.f32 %v668, %v743
    %v747 = vxor.u32 %v745, 2147483648
    %v748 = vmul.f32 %v747, 1.442695
    %v749 = vpow.pop %v748
    %v750 = vadd.f32 %v749, 1.0
    %v751 = vrcp.pop %v750
    %v752 = vmul.f32 1.0, %v751
    %v753 = vtanh.pop %v746
    %v754 = vxor.u32 %v746, 2147483648
    %v755 = vmul.f32 %v754, 1.442695
    %v756 = vpow.pop %v755
    %v757 = vadd.f32 %v756, 1.0
    %v758 = vrcp.pop %v757
    %v759 = vmul.f32 1.0, %v758
    %v760 = vmul.f32 %v752, %v663
    %v761 = vmul.f32 %v752, %v753
    %763 = vrot.lane.b32.xlu0 %v761, 64
    %v764 = vpop.permute.xlu0 %763
    %v766 = vadd.f32 %v760, %v764
    %v767 = vtanh.pop %v766
    %v768 = vmul.f32 %v759, %v767
    %s769 = scalar_lea.vmem [#allocation2], 80
    %v770 = vld [vmem:[%s769] sm:$0xff]
    %v771 = vld [vmem:[%s769 + $0x8] sm:$0xff]
    %773 = vrot.lane.b32.xlu0 %v768, 64
    %v774 = vpop.permute.xlu0 %773
    %v775 = vsel %vm258, %v774, 0
    %777 = vmatprep.subr.mxu0 %v241
    %778 = vmatpush1.msra.mxu0 %v240
    %779 = vmatprep.subr.mxu0 %v243
    %780 = vmatpush1.msra.mxu0 %v242
    %781 = vmatprep.subr.mxu0 %v245
    %782 = vmatpush1.msra.mxu0 %v244
    %783 = vmatprep.subr.mxu0 %v247
    %784 = vmatpush1.msra.mxu0 %v246
    %785 = vmatprep.subr.mxu0 %v249
    %786 = vmatpush1.msra.mxu0 %v248
    %787 = vmatprep.subr.mxu0 %v251
    %788 = vmatpush1.msra.mxu0 %v250
    %789 = vmatprep.subr.mxu0 %v253
    %790 = vmatpush1.msra.mxu0 %v252
    %791 = vmatprep.subr.mxu0 %v255
    %792 = vmatpush1.msra.mxu0 %v254
    %793 = vmatprep.subr.mxu0 0.0
    %794 = vmatpush1.msra.mxu0 0.0
    %795 = vmatprep.subr.mxu0 0.0
    %796 = vmatpush1.msra.mxu0 0.0
    %797 = vmatprep.subr.mxu0 0.0
    %798 = vmatpush1.msra.mxu0 0.0
    %799 = vmatprep.subr.mxu0 0.0
    %800 = vmatpush1.msra.mxu0 0.0
    %801 = vmatprep.subr.mxu0 0.0
    %802 = vmatpush1.msra.mxu0 0.0
    %803 = vmatprep.subr.mxu0 0.0
    %804 = vmatpush1.msra.mxu0 0.0
    %805 = vmatprep.subr.mxu0 0.0
    %806 = vmatpush1.msra.mxu0 0.0
    %807 = vmatprep.subr.mxu0 0.0
    %808 = vmatpush1.msra.mxu0 0.0
    %809 = vmatprep.subr.mxu0 0.0
    %810 = vmatpush1.msra.mxu0 0.0
    %811 = vmatprep.subr.mxu0 0.0
    %812 = vmatpush1.msra.mxu0 0.0
    %813 = vmatprep.subr.mxu0 0.0
    %814 = vmatpush1.msra.mxu0 0.0
    %815 = vmatprep.subr.mxu0 0.0
    %816 = vmatpush1.msra.mxu0 0.0
    %817 = vmatprep.subr.mxu0 0.0
    %818 = vmatpush1.msra.mxu0 0.0
    %819 = vmatprep.subr.mxu0 0.0
    %820 = vmatpush1.msra.mxu0 0.0
    %821 = vmatprep.subr.mxu0 0.0
    %822 = vmatpush1.msra.mxu0 0.0
    %823 = vmatprep.subr.mxu0 0.0
    %824 = vmatpush1.msra.mxu0 0.0
    %825 = vmatprep.subr.mxu0 0.0
    %826 = vmatpush1.msra.mxu0 0.0
    %827 = vmatprep.subr.mxu0 0.0
    %828 = vmatpush1.msra.mxu0 0.0
    %829 = vmatprep.subr.mxu0 0.0
    %830 = vmatpush1.msra.mxu0 0.0
    %831 = vmatprep.subr.mxu0 0.0
    %832 = vmatpush1.msra.mxu0 0.0
    %833 = vmatprep.subr.mxu0 0.0
    %834 = vmatpush1.msra.mxu0 0.0
    %835 = vmatprep.subr.mxu0 0.0
    %836 = vmatpush1.msra.mxu0 0.0
    %837 = vmatprep.subr.mxu0 0.0
    %838 = vmatpush1.msra.mxu0 0.0
    %839 = vmatprep.subr.mxu0 0.0
    %840 = vmatpush1.msra.mxu0 0.0
    %841 = vmatprep.mubr.f32.mxu0 0.0
    %842 = vmatmul.mubr.f32.gmra.mrb[0].mxu0 %v775
    %v843 = vpop.f32.mrb[0].mxu0
    %v844 = vadd.f32 0.0, %v843
    %v845 = vpop.f32.mrb[0].mxu0
    %v846 = vadd.f32 0.0, %v845
    %847 = vdwg.mxu0
    %v848 = vadd.f32 %v770, %v844
    %v849 = vadd.f32 %v771, %v846
    %v850 = vxor.u32 %v848, 2147483648
    %v851 = vmul.f32 %v850, 1.442695
    %v852 = vpow.pop %v851
    %v853 = vadd.f32 %v852, 1.0
    %v854 = vrcp.pop %v853
    %v855 = vmul.f32 1.0, %v854
    %v856 = vtanh.pop %v849
    %v857 = vxor.u32 %v849, 2147483648
    %v858 = vmul.f32 %v857, 1.442695
    %v859 = vpow.pop %v858
    %v860 = vadd.f32 %v859, 1.0
    %v861 = vrcp.pop %v860
    %v862 = vmul.f32 1.0, %v861
    %v863 = vmul.f32 %v855, %v766
    %v864 = vmul.f32 %v855, %v856
    %866 = vrot.lane.b32.xlu0 %v864, 64
    %v867 = vpop.permute.xlu0 %866
    %v869 = vadd.f32 %v863, %v867
    %v870 = vtanh.pop %v869
    %v871 = vmul.f32 %v862, %v870
    %s872 = scalar_lea.vmem [#allocation2], 96
    %v873 = vld [vmem:[%s872] sm:$0xff]
    %v874 = vld [vmem:[%s872 + $0x8] sm:$0xff]
    %876 = vrot.lane.b32.xlu0 %v871, 64
    %v877 = vpop.permute.xlu0 %876
    %v878 = vsel %vm258, %v877, 0
    %880 = vmatprep.subr.mxu0 %v241
    %881 = vmatpush1.msra.mxu0 %v240
    %882 = vmatprep.subr.mxu0 %v243
    %883 = vmatpush1.msra.mxu0 %v242
    %884 = vmatprep.subr.mxu0 %v245
    %885 = vmatpush1.msra.mxu0 %v244
    %886 = vmatprep.subr.mxu0 %v247
    %887 = vmatpush1.msra.mxu0 %v246
    %888 = vmatprep.subr.mxu0 %v249
    %889 = vmatpush1.msra.mxu0 %v248
    %890 = vmatprep.subr.mxu0 %v251
    %891 = vmatpush1.msra.mxu0 %v250
    %892 = vmatprep.subr.mxu0 %v253
    %893 = vmatpush1.msra.mxu0 %v252
    %894 = vmatprep.subr.mxu0 %v255
    %895 = vmatpush1.msra.mxu0 %v254
    %896 = vmatprep.subr.mxu0 0.0
    %897 = vmatpush1.msra.mxu0 0.0
    %898 = vmatprep.subr.mxu0 0.0
    %899 = vmatpush1.msra.mxu0 0.0
    %900 = vmatprep.subr.mxu0 0.0
    %901 = vmatpush1.msra.mxu0 0.0
    %902 = vmatprep.subr.mxu0 0.0
    %903 = vmatpush1.msra.mxu0 0.0
    %904 = vmatprep.subr.mxu0 0.0
    %905 = vmatpush1.msra.mxu0 0.0
    %906 = vmatprep.subr.mxu0 0.0
    %907 = vmatpush1.msra.mxu0 0.0
    %908 = vmatprep.subr.mxu0 0.0
    %909 = vmatpush1.msra.mxu0 0.0
    %910 = vmatprep.subr.mxu0 0.0
    %911 = vmatpush1.msra.mxu0 0.0
    %912 = vmatprep.subr.mxu0 0.0
    %913 = vmatpush1.msra.mxu0 0.0
    %914 = vmatprep.subr.mxu0 0.0
    %915 = vmatpush1.msra.mxu0 0.0
    %916 = vmatprep.subr.mxu0 0.0
    %917 = vmatpush1.msra.mxu0 0.0
    %918 = vmatprep.subr.mxu0 0.0
    %919 = vmatpush1.msra.mxu0 0.0
    %920 = vmatprep.subr.mxu0 0.0
    %921 = vmatpush1.msra.mxu0 0.0
    %922 = vmatprep.subr.mxu0 0.0
    %923 = vmatpush1.msra.mxu0 0.0
    %924 = vmatprep.subr.mxu0 0.0
    %925 = vmatpush1.msra.mxu0 0.0
    %926 = vmatprep.subr.mxu0 0.0
    %927 = vmatpush1.msra.mxu0 0.0
    %928 = vmatprep.subr.mxu0 0.0
    %929 = vmatpush1.msra.mxu0 0.0
    %930 = vmatprep.subr.mxu0 0.0
    %931 = vmatpush1.msra.mxu0 0.0
    %932 = vmatprep.subr.mxu0 0.0
    %933 = vmatpush1.msra.mxu0 0.0
    %934 = vmatprep.subr.mxu0 0.0
    %935 = vmatpush1.msra.mxu0 0.0
    %936 = vmatprep.subr.mxu0 0.0
    %937 = vmatpush1.msra.mxu0 0.0
    %938 = vmatprep.subr.mxu0 0.0
    %939 = vmatpush1.msra.mxu0 0.0
    %940 = vmatprep.subr.mxu0 0.0
    %941 = vmatpush1.msra.mxu0 0.0
    %942 = vmatprep.subr.mxu0 0.0
    %943 = vmatpush1.msra.mxu0 0.0
    %944 = vmatprep.mubr.f32.mxu0 0.0
    %945 = vmatmul.mubr.f32.gmra.mrb[0].mxu0 %v878
    %v946 = vpop.f32.mrb[0].mxu0
    %v947 = vadd.f32 0.0, %v946
    %v948 = vpop.f32.mrb[0].mxu0
    %v949 = vadd.f32 0.0, %v948
    %950 = vdwg.mxu0
    %v951 = vadd.f32 %v873, %v947
    %v952 = vadd.f32 %v874, %v949
    %v953 = vxor.u32 %v951, 2147483648
    %v954 = vmul.f32 %v953, 1.442695
    %v955 = vpow.pop %v954
    %v956 = vadd.f32 %v955, 1.0
    %v957 = vrcp.pop %v956
    %v958 = vmul.f32 1.0, %v957
    %v959 = vtanh.pop %v952
    %v960 = vxor.u32 %v952, 2147483648
    %v961 = vmul.f32 %v960, 1.442695
    %v962 = vpow.pop %v961
    %v963 = vadd.f32 %v962, 1.0
    %v964 = vrcp.pop %v963
    %v965 = vmul.f32 1.0, %v964
    %v966 = vmul.f32 %v958, %v869
    %v967 = vmul.f32 %v958, %v959
    %969 = vrot.lane.b32.xlu0 %v967, 64
    %v970 = vpop.permute.xlu0 %969
    %v972 = vadd.f32 %v966, %v970
    %v973 = vtanh.pop %v972
    %v974 = vmul.f32 %v965, %v973
    %s975 = scalar_lea.vmem [#allocation2], 112
    %v976 = vld [vmem:[%s975] sm:$0xff]
    %v977 = vld [vmem:[%s975 + $0x8] sm:$0xff]
    %979 = vrot.lane.b32.xlu0 %v974, 64
    %v980 = vpop.permute.xlu0 %979
    %v981 = vsel %vm258, %v980, 0
    %983 = vmatprep.subr.mxu0 %v241
    %984 = vmatpush1.msra.mxu0 %v240
    %985 = vmatprep.subr.mxu0 %v243
    %986 = vmatpush1.msra.mxu0 %v242
    %987 = vmatprep.subr.mxu0 %v245
    %988 = vmatpush1.msra.mxu0 %v244
    %989 = vmatprep.subr.mxu0 %v247
    %990 = vmatpush1.msra.mxu0 %v246
    %991 = vmatprep.subr.mxu0 %v249
    %992 = vmatpush1.msra.mxu0 %v248
    %993 = vmatprep.subr.mxu0 %v251
    %994 = vmatpush1.msra.mxu0 %v250
    %995 = vmatprep.subr.mxu0 %v253
    %996 = vmatpush1.msra.mxu0 %v252
    %997 = vmatprep.subr.mxu0 %v255
    %998 = vmatpush1.msra.mxu0 %v254
    %999 = vmatprep.subr.mxu0 0.0
    %1000 = vmatpush1.msra.mxu0 0.0
    %1001 = vmatprep.subr.mxu0 0.0
    %1002 = vmatpush1.msra.mxu0 0.0
    %1003 = vmatprep.subr.mxu0 0.0
    %1004 = vmatpush1.msra.mxu0 0.0
    %1005 = vmatprep.subr.mxu0 0.0
    %1006 = vmatpush1.msra.mxu0 0.0
    %1007 = vmatprep.subr.mxu0 0.0
    %1008 = vmatpush1.msra.mxu0 0.0
    %1009 = vmatprep.subr.mxu0 0.0
    %1010 = vmatpush1.msra.mxu0 0.0
    %1011 = vmatprep.subr.mxu0 0.0
    %1012 = vmatpush1.msra.mxu0 0.0
    %1013 = vmatprep.subr.mxu0 0.0
    %1014 = vmatpush1.msra.mxu0 0.0
    %1015 = vmatprep.subr.mxu0 0.0
    %1016 = vmatpush1.msra.mxu0 0.0
    %1017 = vmatprep.subr.mxu0 0.0
    %1018 = vmatpush1.msra.mxu0 0.0
    %1019 = vmatprep.subr.mxu0 0.0
    %1020 = vmatpush1.msra.mxu0 0.0
    %1021 = vmatprep.subr.mxu0 0.0
    %1022 = vmatpush1.msra.mxu0 0.0
    %1023 = vmatprep.subr.mxu0 0.0
    %1024 = vmatpush1.msra.mxu0 0.0
    %1025 = vmatprep.subr.mxu0 0.0
    %1026 = vmatpush1.msra.mxu0 0.0
    %1027 = vmatprep.subr.mxu0 0.0
    %1028 = vmatpush1.msra.mxu0 0.0
    %1029 = vmatprep.subr.mxu0 0.0
    %1030 = vmatpush1.msra.mxu0 0.0
    %1031 = vmatprep.subr.mxu0 0.0
    %1032 = vmatpush1.msra.mxu0 0.0
    %1033 = vmatprep.subr.mxu0 0.0
    %1034 = vmatpush1.msra.mxu0 0.0
    %1035 = vmatprep.subr.mxu0 0.0
    %1036 = vmatpush1.msra.mxu0 0.0
    %1037 = vmatprep.subr.mxu0 0.0
    %1038 = vmatpush1.msra.mxu0 0.0
    %1039 = vmatprep.subr.mxu0 0.0
    %1040 = vmatpush1.msra.mxu0 0.0
    %1041 = vmatprep.subr.mxu0 0.0
    %1042 = vmatpush1.msra.mxu0 0.0
    %1043 = vmatprep.subr.mxu0 0.0
    %1044 = vmatpush1.msra.mxu0 0.0
    %1045 = vmatprep.subr.mxu0 0.0
    %1046 = vmatpush1.msra.mxu0 0.0
    %1047 = vmatprep.mubr.f32.mxu0 0.0
    %1048 = vmatmul.mubr.f32.gmra.mrb[0].mxu0 %v981
    %v1049 = vpop.f32.mrb[0].mxu0
    %v1050 = vadd.f32 0.0, %v1049
    %v1051 = vpop.f32.mrb[0].mxu0
    %v1052 = vadd.f32 0.0, %v1051
    %1053 = vdwg.mxu0
    %v1054 = vadd.f32 %v976, %v1050
    %v1055 = vadd.f32 %v977, %v1052
    %v1056 = vxor.u32 %v1054, 2147483648
    %v1057 = vmul.f32 %v1056, 1.442695
    %v1058 = vpow.pop %v1057
    %v1059 = vadd.f32 %v1058, 1.0
    %v1060 = vrcp.pop %v1059
    %v1061 = vmul.f32 1.0, %v1060
    %v1062 = vtanh.pop %v1055
    %v1063 = vxor.u32 %v1055, 2147483648
    %v1064 = vmul.f32 %v1063, 1.442695
    %v1065 = vpow.pop %v1064
    %v1066 = vadd.f32 %v1065, 1.0
    %v1067 = vrcp.pop %v1066
    %v1068 = vmul.f32 1.0, %v1067
    %v1069 = vmul.f32 %v1061, %v972
    %v1070 = vmul.f32 %v1061, %v1062
    %1072 = vrot.lane.b32.xlu0 %v1070, 64
    %v1073 = vpop.permute.xlu0 %1072
    %v1075 = vadd.f32 %v1069, %v1073
    %v1076 = vtanh.pop %v1075
    %v1077 = vmul.f32 %v1068, %v1076
    %1079 = vrot.lane.b32.xlu0 %v1077, 64
    %v1080 = vpop.permute.xlu0 %1079
    %1082 = vst.msk [vmem:[#allocation9] sm:$0xff] %vm258, %v1080
    %1084 = vrot.lane.b32.xlu0 %v1075, 64
    %v1085 = vpop.permute.xlu0 %1084
    %1087 = vst.msk [vmem:[#allocation10] sm:$0xff] %vm258, %v1085
    // Predicated region
    $region30: #{tpu_custom_call.1} parent=1 // pred_check
      _
    $region31: #{tpu_custom_call.1} parent=1 // pred_check_branch
      %1089 = sbr.rel (0) target = $region33
    $region32: #{tpu_custom_call.1} parent=1 // pred_region
      %s1091 = ssub.s32 128, 128
      %1092 = vsyncadd [#allocation5], %s1091
      %s1094 = sshll.u32 [#allocation9], 4
      %s1095 = int_to_ptr.vmem [resolvable:$true] %s1094
      %1097 = dma.vmem_to_hbm [thread:$0]  %s1095, 128, %s4, [#allocation5]
    $region33: #{tpu_custom_call.1} parent=1 // pred_fallthru
      _
    // Predicated region
    $region34: #{tpu_custom_call.1} parent=1 // pred_check
      _
    $region35: #{tpu_custom_call.1} parent=1 // pred_check_branch
      %1099 = sbr.rel (0) target = $region37
    $region36: #{tpu_custom_call.1} parent=1 // pred_region
      %s1101 = ssub.s32 128, 128
      %1102 = vsyncadd [#allocation11], %s1101
      %s1104 = sshll.u32 [#allocation10], 4
      %s1105 = int_to_ptr.vmem [resolvable:$true] %s1104
      %1107 = dma.vmem_to_hbm [thread:$0]  %s1105, 128, %s5, [#allocation11]
    $region37: #{tpu_custom_call.1} parent=1 // pred_fallthru
      _
    // Predicated region
    $region38: #{tpu_custom_call.1} parent=1 // pred_check
      _
    $region39: #{tpu_custom_call.1} parent=1 // pred_check_branch
      %1109 = sbr.rel (0) target = $region41
    $region40: #{tpu_custom_call.1} parent=1 // pred_region
      %1110 = dma.done [#allocation5], 128
    $region41: #{tpu_custom_call.1} parent=1 // pred_fallthru
      _
    // Predicated region
    $region42: #{tpu_custom_call.1} parent=1 // pred_check
      _
    $region43: #{tpu_custom_call.1} parent=1 // pred_check_branch
      %1112 = sbr.rel (0) target = $region45
    $region44: #{tpu_custom_call.1} parent=1 // pred_region
      %1113 = dma.done [#allocation11], 128
    $region45: #{tpu_custom_call.1} parent=1 // pred_fallthru
      _
    %1114 = vsyncpa [#allocation4], 1
    %1115 = vsyncpa [#allocation7], 1
    %1116 = vsyncpa [#allocation5], 1
    %1117 = vsyncpa [#allocation11], 1

</llo_original>
